<compile_context>
chip_gen: v7x
topology: tpu7x:2x2x1
jax: 0.10.0
libtpu: 0.0.40
codegen_flags: <defaults>
</compile_context>

<pallas_src>
import functools

import jax
import jax.numpy as jnp
from jax.experimental import pallas as pl
from jax.experimental.pallas import tpu as pltpu

EPS = 1e-5


def basic_block_kernel(C, x_ref, w1_ref, w2_ref, g1_ref, b1_ref, g2_ref,
                       b2_ref, agg_ref, out_ref, xpad_ref, mid_ref):
    # x_ref   : (N, H, W*C)          f32  input, width*channels on the lane axis
    # w*_ref  : (3*(W+2)*C, W*C)     bf16 block-banded conv weights (see wrapper)
    # g*/b*   : (1, W*C)             f32  batchnorm gamma/beta, pre-tiled per lane
    # agg_ref : (W*C, W*C)           f32  0/1 channel-aggregation matrix
    # out_ref : (N*H, W*C)           f32  lane-dense output
    # xpad_ref: (N, H+2, (W+2)*C)    bf16 scratch: zero-padded conv1 input
    # mid_ref : (N, H+2, (W+2)*C)    bf16 scratch: zero-padded conv2 input
    N, H, L = x_ref.shape
    W = L // C
    KB = (W + 2) * C              # one padded row band, flattened (wp, cin)
    R = N * H
    inv_m = 1.0 / (N * H * W)

    def fill_padded(dst_ref, interior):
        # One dense zero fill of the whole padded buffer, then a single
        # interior store shifted by C lanes (the left width-halo).
        dst_ref[...] = jnp.zeros(dst_ref.shape, dst_ref.dtype)
        dst_ref[:, 1:1 + H, C:C + L] = interior.astype(dst_ref.dtype)

    def conv3x3(src_ref, w_ref):
        # Banded GEMM: for each kernel row kh, the (R, KB) input band times the
        # (KB, L) banded weight block yields that row's full conv contribution,
        # already in lane-dense (R, W*C) order.  bf16 MXU, f32 accumulation.
        src = src_ref[...]
        y = None
        for kh in range(3):
            band = src[:, kh:kh + H, :].reshape(R, KB)      # leading-dim merge
            p = jnp.dot(band, w_ref[kh * KB:(kh + 1) * KB, :],
                        preferred_element_type=jnp.float32)
            y = p if y is None else y + p
        return y                                            # (R, L) f32

    def channel_stats(v):
        # Per-channel totals of a lane-dense (R, L) value, returned already
        # broadcast to every (w, c) lane: agg[i, j] = (i % C == j % C).
        t = jnp.dot(v, agg_ref[...], preferred_element_type=jnp.float32)
        return jnp.sum(t, axis=0, keepdims=True)            # (1, L)

    def batchnorm(y, g_ref, b_ref):
        # Training-mode BN (batch stats, biased variance), lane-dense layout.
        mean_t = channel_stats(y) * inv_m
        yc = y - mean_t
        var_t = channel_stats(yc * yc) * inv_m
        scale_t = jax.lax.rsqrt(var_t + EPS) * g_ref[...]
        return yc * scale_t + b_ref[...]

    # --- conv1 -> bn1 -> relu --------------------------------------------
    fill_padded(xpad_ref, x_ref[...])
    out1 = jnp.maximum(batchnorm(conv3x3(xpad_ref, w1_ref), g1_ref, b1_ref),
                       0.0)

    # --- re-pad intermediate (bf16, single interior store) ----------------
    fill_padded(mid_ref, out1.reshape(N, H, L))              # leading-dim split

    # --- conv2 -> bn2 -> +identity -> relu, single dense store ------------
    out2 = batchnorm(conv3x3(mid_ref, w2_ref), g2_ref, b2_ref)
    identity = x_ref[...].reshape(R, L)          # Cin == Cout, stride == 1
    out_ref[...] = jnp.maximum(out2 + identity, 0.0)


def _banded_weight(w_hwio, W):
    """(3, 3, Cin, Cout) HWIO -> (3*(W+2)*Cin, W*Cout) block-banded matrix.

    Row index = kh*(W+2)*Cin + wp*Cin + cin, col index = w*Cout + cout, entry
    = w_hwio[kh, wp-w, cin, cout] when 0 <= wp-w <= 2 else 0.  A padded input
    row band (flattened width*channels) times this matrix equals the 3x3 conv
    output row, already in lane-dense (w, cout) order.
    """
    kh, kw, cin, cout = w_hwio.shape
    wp = W + 2
    bw = jnp.zeros((kh, wp, cin, W, cout), w_hwio.dtype)
    for w in range(W):
        for k in range(kw):
            bw = bw.at[:, w + k, :, w, :].set(w_hwio[:, k, :, :])
    return bw.reshape(kh * wp * cin, W * cout)


def basic_block(x_nchw, w1, w2, g1, b1, g2, b2):
    """x_nchw: (N, C, H, W) f32; w*: (3, 3, Cin, Cout) HWIO; g*/b*: (Cout,)."""
    N, C, H, W = x_nchw.shape
    Cout = w1.shape[-1]
    assert C == Cout, "identity path requires in_channels == out_channels"
    L = W * Cout

    # NCHW -> NHWC -> (N, H, W*C): channels/width on the 128-lane axis.
    # TODO(synk): in an NHWC end-to-end model these transposes disappear.
    x = jnp.transpose(x_nchw, (0, 2, 3, 1)).reshape(N, H, L)

    # Banded bf16 conv weights and lane-tiled f32 BN parameters.
    w1b = _banded_weight(w1, W).astype(jnp.bfloat16)
    w2b = _banded_weight(w2, W).astype(jnp.bfloat16)
    g1t = jnp.tile(g1.reshape(1, Cout), (1, W))
    b1t = jnp.tile(b1.reshape(1, Cout), (1, W))
    g2t = jnp.tile(g2.reshape(1, Cout), (1, W))
    b2t = jnp.tile(b2.reshape(1, Cout), (1, W))
    # 0/1 channel-aggregation matrix: agg[i, j] = 1 iff i % C == j % C.
    lanes = jnp.arange(L)
    agg = (lanes[:, None] % Cout == lanes[None, :] % Cout).astype(jnp.float32)

    vmem = pl.BlockSpec(memory_space=pltpu.MemorySpace.VMEM)
    out2d = pl.pallas_call(
        functools.partial(basic_block_kernel, C),
        out_shape=jax.ShapeDtypeStruct((N * H, L), jnp.float32),
        in_specs=[vmem] * 8,
        out_specs=vmem,
        scratch_shapes=[
            pltpu.VMEM((N, H + 2, (W + 2) * C), jnp.bfloat16),     # padded x
            pltpu.VMEM((N, H + 2, (W + 2) * Cout), jnp.bfloat16),  # padded mid
        ],
    )(x, w1b, w2b, g1t, b1t, g2t, b2t, agg)

    out_nhwc = out2d.reshape(N, H, W, Cout)
    return jnp.transpose(out_nhwc, (0, 3, 1, 2))                    # -> NCHW


def reference(x_nchw, w1, w2, g1, b1, g2, b2):
    """Plain-JAX f32 reference (matches PyTorch BasicBlock forward, training BN)."""
    def conv(x, w):
        return jax.lax.conv_general_dilated(
            x, w, (1, 1), ((1, 1), (1, 1)),
            dimension_numbers=("NCHW", "HWIO", "NCHW"))

    def bn(x, g, b):
        mean = jnp.mean(x, axis=(0, 2, 3), keepdims=True)
        var = jnp.mean(jnp.square(x - mean), axis=(0, 2, 3), keepdims=True)
        return ((x - mean) * jax.lax.rsqrt(var + EPS)
                * g.reshape(1, -1, 1, 1) + b.reshape(1, -1, 1, 1))

    out = jnp.maximum(bn(conv(x_nchw, w1), g1, b1), 0.0)
    out = bn(conv(out, w2), g2, b2) + x_nchw
    return jnp.maximum(out, 0.0)


if __name__ == "__main__":
    N, C, H, W = 2, 8, 16, 16      # in_channels == out_channels, stride=1
    Cout = C

    key = jax.random.PRNGKey(0)
    kx, kw1, kw2, kg1, kb1, kg2, kb2 = jax.random.split(key, 7)

    x = jax.random.normal(kx, (N, C, H, W), jnp.float32)
    w1 = jax.random.normal(kw1, (3, 3, C, Cout), jnp.float32) * 0.2
    w2 = jax.random.normal(kw2, (3, 3, Cout, Cout), jnp.float32) * 0.2
    g1 = 1.0 + 0.1 * jax.random.normal(kg1, (Cout,), jnp.float32)
    b1 = 0.1 * jax.random.normal(kb1, (Cout,), jnp.float32)
    g2 = 1.0 + 0.1 * jax.random.normal(kg2, (Cout,), jnp.float32)
    b2 = 0.1 * jax.random.normal(kb2, (Cout,), jnp.float32)

    out = jax.block_until_ready(basic_block(x, w1, w2, g1, b1, g2, b2))
    ref = jax.block_until_ready(reference(x, w1, w2, g1, b1, g2, b2))

    assert out.shape == (N, Cout, H, W)
    # Tolerance sized for bf16 MXU operands / bf16 padded activations (two
    # convs carried through BatchNorm); reference is pure f32.
    assert jnp.allclose(out, ref, rtol=2e-2, atol=5e-2), \
        f"max abs err {jnp.max(jnp.abs(out - ref))}"
    print("KERNEL_OK")
</pallas_src>

<mosaic_0001>
module attributes {stable_mosaic.version = 11 : i64} {
  func.func @basic_block_kernel(%arg0: memref<2x16x128xf32, #tpu.memory_space<vmem>>, %arg1: memref<432x128xbf16, #tpu.memory_space<vmem>>, %arg2: memref<432x128xbf16, #tpu.memory_space<vmem>>, %arg3: memref<1x128xf32, #tpu.memory_space<vmem>>, %arg4: memref<1x128xf32, #tpu.memory_space<vmem>>, %arg5: memref<1x128xf32, #tpu.memory_space<vmem>>, %arg6: memref<1x128xf32, #tpu.memory_space<vmem>>, %arg7: memref<128x128xf32, #tpu.memory_space<vmem>>, %arg8: memref<32x128xf32, #tpu.memory_space<vmem>>, %arg9: memref<2x18x144xbf16, #tpu.memory_space<vmem>>, %arg10: memref<2x18x144xbf16, #tpu.memory_space<vmem>>) attributes {dimension_semantics = [], scalar_prefetch = 0 : i64, scratch_operands = 2 : i64, tpu.core_type = #tpu.core_type<tc>} {
    %c0 = arith.constant 0 : index
    %c0_0 = arith.constant 0 : index
    %c0_1 = arith.constant 0 : index
    %0 = vector.load %arg0[%c0, %c0_0, %c0_1] : memref<2x16x128xf32, #tpu.memory_space<vmem>>, vector<2x16x128xf32>
    %cst = arith.constant 0.000000e+00 : bf16
    %1 = vector.broadcast %cst : bf16 to vector<2x18x144xbf16>
    %c0_2 = arith.constant 0 : index
    %c0_3 = arith.constant 0 : index
    %c0_4 = arith.constant 0 : index
    %2 = vector.load %arg9[%c0_2, %c0_3, %c0_4] : memref<2x18x144xbf16, #tpu.memory_space<vmem>>, vector<2x18x144xbf16>
    tpu.vector_store %arg9[%c0_2, %c0_3, %c0_4], %1 {strides = array<i32>} : memref<2x18x144xbf16, #tpu.memory_space<vmem>>, vector<2x18x144xbf16>,
    %3 = arith.truncf %0 : vector<2x16x128xf32> to vector<2x16x128xbf16>
    %c0_5 = arith.constant 0 : index
    %c1 = arith.constant 1 : index
    %c8 = arith.constant 8 : index
    %4 = vector.load %arg9[%c0_5, %c1, %c8] : memref<2x18x144xbf16, #tpu.memory_space<vmem>>, vector<2x16x128xbf16>
    tpu.vector_store %arg9[%c0_5, %c1, %c8], %3 {strides = array<i32>} : memref<2x18x144xbf16, #tpu.memory_space<vmem>>, vector<2x16x128xbf16>,
    %c0_6 = arith.constant 0 : index
    %c0_7 = arith.constant 0 : index
    %c0_8 = arith.constant 0 : index
    %5 = vector.load %arg9[%c0_6, %c0_7, %c0_8] : memref<2x18x144xbf16, #tpu.memory_space<vmem>>, vector<2x18x144xbf16>
    %6 = vector.extract_strided_slice %5 {offsets = [0, 0, 0], sizes = [2, 16, 144], strides = [1, 1, 1]} : vector<2x18x144xbf16> to vector<2x16x144xbf16>
    %7 = vector.shape_cast %6 : vector<2x16x144xbf16> to vector<32x144xbf16>
    %c0_9 = arith.constant 0 : index
    %c0_10 = arith.constant 0 : index
    %8 = vector.load %arg1[%c0_9, %c0_10] : memref<432x128xbf16, #tpu.memory_space<vmem>>, vector<144x128xbf16>
    %cst_11 = arith.constant dense<0.000000e+00> : vector<32x128xf32>
    %9 = tpu.matmul %7, %8, %cst_11 {dimension_numbers = #tpu.dot_dimension_numbers<[1], [0], [0], [1], [0, 0, 1, 1], [], []>} : vector<32x144xbf16>, vector<144x128xbf16>, vector<32x128xf32> -> vector<32x128xf32>
    %10 = vector.extract_strided_slice %5 {offsets = [0, 1, 0], sizes = [2, 16, 144], strides = [1, 1, 1]} : vector<2x18x144xbf16> to vector<2x16x144xbf16>
    %11 = vector.shape_cast %10 : vector<2x16x144xbf16> to vector<32x144xbf16>
    %c144 = arith.constant 144 : index
    %c0_12 = arith.constant 0 : index
    %12 = vector.load %arg1[%c144, %c0_12] : memref<432x128xbf16, #tpu.memory_space<vmem>>, vector<144x128xbf16>
    %cst_13 = arith.constant dense<0.000000e+00> : vector<32x128xf32>
    %13 = tpu.matmul %11, %12, %cst_13 {dimension_numbers = #tpu.dot_dimension_numbers<[1], [0], [0], [1], [0, 0, 1, 1], [], []>} : vector<32x144xbf16>, vector<144x128xbf16>, vector<32x128xf32> -> vector<32x128xf32>
    %14 = arith.addf %9, %13 : vector<32x128xf32>
    %15 = vector.extract_strided_slice %5 {offsets = [0, 2, 0], sizes = [2, 16, 144], strides = [1, 1, 1]} : vector<2x18x144xbf16> to vector<2x16x144xbf16>
    %16 = vector.shape_cast %15 : vector<2x16x144xbf16> to vector<32x144xbf16>
    %c288 = arith.constant 288 : index
    %c0_14 = arith.constant 0 : index
    %17 = vector.load %arg1[%c288, %c0_14] : memref<432x128xbf16, #tpu.memory_space<vmem>>, vector<144x128xbf16>
    %cst_15 = arith.constant dense<0.000000e+00> : vector<32x128xf32>
    %18 = tpu.matmul %16, %17, %cst_15 {dimension_numbers = #tpu.dot_dimension_numbers<[1], [0], [0], [1], [0, 0, 1, 1], [], []>} : vector<32x144xbf16>, vector<144x128xbf16>, vector<32x128xf32> -> vector<32x128xf32>
    %19 = arith.addf %14, %18 : vector<32x128xf32>
    %c0_16 = arith.constant 0 : index
    %c0_17 = arith.constant 0 : index
    %20 = vector.load %arg7[%c0_16, %c0_17] : memref<128x128xf32, #tpu.memory_space<vmem>>, vector<128x128xf32>
    %cst_18 = arith.constant dense<0.000000e+00> : vector<32x128xf32>
    %21 = tpu.matmul %19, %20, %cst_18 {dimension_numbers = #tpu.dot_dimension_numbers<[1], [0], [0], [1], [0, 0, 1, 1], [], []>} : vector<32x128xf32>, vector<128x128xf32>, vector<32x128xf32> -> vector<32x128xf32>
    %cst_19 = arith.constant dense<0.000000e+00> : vector<128xf32>
    %22 = vector.multi_reduction <add>, %21, %cst_19 [0] : vector<32x128xf32> to vector<128xf32>
    %23 = vector.shape_cast %22 : vector<128xf32> to vector<1x128xf32>
    %cst_20 = arith.constant 0.001953125 : f32
    %24 = vector.broadcast %cst_20 : f32 to vector<1x128xf32>
    %25 = arith.mulf %23, %24 : vector<1x128xf32>
    %26 = vector.broadcast %25 : vector<1x128xf32> to vector<32x128xf32>
    %27 = arith.subf %19, %26 : vector<32x128xf32>
    %28 = arith.mulf %27, %27 : vector<32x128xf32>
    %c0_21 = arith.constant 0 : index
    %c0_22 = arith.constant 0 : index
    %29 = vector.load %arg7[%c0_21, %c0_22] : memref<128x128xf32, #tpu.memory_space<vmem>>, vector<128x128xf32>
    %cst_23 = arith.constant dense<0.000000e+00> : vector<32x128xf32>
    %30 = tpu.matmul %28, %29, %cst_23 {dimension_numbers = #tpu.dot_dimension_numbers<[1], [0], [0], [1], [0, 0, 1, 1], [], []>} : vector<32x128xf32>, vector<128x128xf32>, vector<32x128xf32> -> vector<32x128xf32>
    %cst_24 = arith.constant dense<0.000000e+00> : vector<128xf32>
    %31 = vector.multi_reduction <add>, %30, %cst_24 [0] : vector<32x128xf32> to vector<128xf32>
    %32 = vector.shape_cast %31 : vector<128xf32> to vector<1x128xf32>
    %cst_25 = arith.constant 0.001953125 : f32
    %33 = vector.broadcast %cst_25 : f32 to vector<1x128xf32>
    %34 = arith.mulf %32, %33 : vector<1x128xf32>
    %cst_26 = arith.constant 9.99999974E-6 : f32
    %35 = vector.broadcast %cst_26 : f32 to vector<1x128xf32>
    %36 = arith.addf %34, %35 : vector<1x128xf32>
    %37 = math.rsqrt %36 : vector<1x128xf32>
    %c0_27 = arith.constant 0 : index
    %c0_28 = arith.constant 0 : index
    %38 = vector.load %arg3[%c0_27, %c0_28] : memref<1x128xf32, #tpu.memory_space<vmem>>, vector<1x128xf32>
    %39 = arith.mulf %37, %38 : vector<1x128xf32>
    %40 = vector.broadcast %39 : vector<1x128xf32> to vector<32x128xf32>
    %41 = arith.mulf %27, %40 : vector<32x128xf32>
    %c0_29 = arith.constant 0 : index
    %c0_30 = arith.constant 0 : index
    %42 = vector.load %arg4[%c0_29, %c0_30] : memref<1x128xf32, #tpu.memory_space<vmem>>, vector<1x128xf32>
    %43 = vector.broadcast %42 : vector<1x128xf32> to vector<32x128xf32>
    %44 = arith.addf %41, %43 : vector<32x128xf32>
    %cst_31 = arith.constant 0.000000e+00 : f32
    %45 = vector.broadcast %cst_31 : f32 to vector<32x128xf32>
    %46 = arith.maximumf %44, %45 : vector<32x128xf32>
    %47 = vector.shape_cast %46 : vector<32x128xf32> to vector<2x16x128xf32>
    %cst_32 = arith.constant 0.000000e+00 : bf16
    %48 = vector.broadcast %cst_32 : bf16 to vector<2x18x144xbf16>
    %c0_33 = arith.constant 0 : index
    %c0_34 = arith.constant 0 : index
    %c0_35 = arith.constant 0 : index
    %49 = vector.load %arg10[%c0_33, %c0_34, %c0_35] : memref<2x18x144xbf16, #tpu.memory_space<vmem>>, vector<2x18x144xbf16>
    tpu.vector_store %arg10[%c0_33, %c0_34, %c0_35], %48 {strides = array<i32>} : memref<2x18x144xbf16, #tpu.memory_space<vmem>>, vector<2x18x144xbf16>,
    %50 = arith.truncf %47 : vector<2x16x128xf32> to vector<2x16x128xbf16>
    %c0_36 = arith.constant 0 : index
    %c1_37 = arith.constant 1 : index
    %c8_38 = arith.constant 8 : index
    %51 = vector.load %arg10[%c0_36, %c1_37, %c8_38] : memref<2x18x144xbf16, #tpu.memory_space<vmem>>, vector<2x16x128xbf16>
    tpu.vector_store %arg10[%c0_36, %c1_37, %c8_38], %50 {strides = array<i32>} : memref<2x18x144xbf16, #tpu.memory_space<vmem>>, vector<2x16x128xbf16>,
    %c0_39 = arith.constant 0 : index
    %c0_40 = arith.constant 0 : index
    %c0_41 = arith.constant 0 : index
    %52 = vector.load %arg10[%c0_39, %c0_40, %c0_41] : memref<2x18x144xbf16, #tpu.memory_space<vmem>>, vector<2x18x144xbf16>
    %53 = vector.extract_strided_slice %52 {offsets = [0, 0, 0], sizes = [2, 16, 144], strides = [1, 1, 1]} : vector<2x18x144xbf16> to vector<2x16x144xbf16>
    %54 = vector.shape_cast %53 : vector<2x16x144xbf16> to vector<32x144xbf16>
    %c0_42 = arith.constant 0 : index
    %c0_43 = arith.constant 0 : index
    %55 = vector.load %arg2[%c0_42, %c0_43] : memref<432x128xbf16, #tpu.memory_space<vmem>>, vector<144x128xbf16>
    %cst_44 = arith.constant dense<0.000000e+00> : vector<32x128xf32>
    %56 = tpu.matmul %54, %55, %cst_44 {dimension_numbers = #tpu.dot_dimension_numbers<[1], [0], [0], [1], [0, 0, 1, 1], [], []>} : vector<32x144xbf16>, vector<144x128xbf16>, vector<32x128xf32> -> vector<32x128xf32>
    %57 = vector.extract_strided_slice %52 {offsets = [0, 1, 0], sizes = [2, 16, 144], strides = [1, 1, 1]} : vector<2x18x144xbf16> to vector<2x16x144xbf16>
    %58 = vector.shape_cast %57 : vector<2x16x144xbf16> to vector<32x144xbf16>
    %c144_45 = arith.constant 144 : index
    %c0_46 = arith.constant 0 : index
    %59 = vector.load %arg2[%c144_45, %c0_46] : memref<432x128xbf16, #tpu.memory_space<vmem>>, vector<144x128xbf16>
    %cst_47 = arith.constant dense<0.000000e+00> : vector<32x128xf32>
    %60 = tpu.matmul %58, %59, %cst_47 {dimension_numbers = #tpu.dot_dimension_numbers<[1], [0], [0], [1], [0, 0, 1, 1], [], []>} : vector<32x144xbf16>, vector<144x128xbf16>, vector<32x128xf32> -> vector<32x128xf32>
    %61 = arith.addf %56, %60 : vector<32x128xf32>
    %62 = vector.extract_strided_slice %52 {offsets = [0, 2, 0], sizes = [2, 16, 144], strides = [1, 1, 1]} : vector<2x18x144xbf16> to vector<2x16x144xbf16>
    %63 = vector.shape_cast %62 : vector<2x16x144xbf16> to vector<32x144xbf16>
    %c288_48 = arith.constant 288 : index
    %c0_49 = arith.constant 0 : index
    %64 = vector.load %arg2[%c288_48, %c0_49] : memref<432x128xbf16, #tpu.memory_space<vmem>>, vector<144x128xbf16>
    %cst_50 = arith.constant dense<0.000000e+00> : vector<32x128xf32>
    %65 = tpu.matmul %63, %64, %cst_50 {dimension_numbers = #tpu.dot_dimension_numbers<[1], [0], [0], [1], [0, 0, 1, 1], [], []>} : vector<32x144xbf16>, vector<144x128xbf16>, vector<32x128xf32> -> vector<32x128xf32>
    %66 = arith.addf %61, %65 : vector<32x128xf32>
    %c0_51 = arith.constant 0 : index
    %c0_52 = arith.constant 0 : index
    %67 = vector.load %arg7[%c0_51, %c0_52] : memref<128x128xf32, #tpu.memory_space<vmem>>, vector<128x128xf32>
    %cst_53 = arith.constant dense<0.000000e+00> : vector<32x128xf32>
    %68 = tpu.matmul %66, %67, %cst_53 {dimension_numbers = #tpu.dot_dimension_numbers<[1], [0], [0], [1], [0, 0, 1, 1], [], []>} : vector<32x128xf32>, vector<128x128xf32>, vector<32x128xf32> -> vector<32x128xf32>
    %cst_54 = arith.constant dense<0.000000e+00> : vector<128xf32>
    %69 = vector.multi_reduction <add>, %68, %cst_54 [0] : vector<32x128xf32> to vector<128xf32>
    %70 = vector.shape_cast %69 : vector<128xf32> to vector<1x128xf32>
    %cst_55 = arith.constant 0.001953125 : f32
    %71 = vector.broadcast %cst_55 : f32 to vector<1x128xf32>
    %72 = arith.mulf %70, %71 : vector<1x128xf32>
    %73 = vector.broadcast %72 : vector<1x128xf32> to vector<32x128xf32>
    %74 = arith.subf %66, %73 : vector<32x128xf32>
    %75 = arith.mulf %74, %74 : vector<32x128xf32>
    %c0_56 = arith.constant 0 : index
    %c0_57 = arith.constant 0 : index
    %76 = vector.load %arg7[%c0_56, %c0_57] : memref<128x128xf32, #tpu.memory_space<vmem>>, vector<128x128xf32>
    %cst_58 = arith.constant dense<0.000000e+00> : vector<32x128xf32>
    %77 = tpu.matmul %75, %76, %cst_58 {dimension_numbers = #tpu.dot_dimension_numbers<[1], [0], [0], [1], [0, 0, 1, 1], [], []>} : vector<32x128xf32>, vector<128x128xf32>, vector<32x128xf32> -> vector<32x128xf32>
    %cst_59 = arith.constant dense<0.000000e+00> : vector<128xf32>
    %78 = vector.multi_reduction <add>, %77, %cst_59 [0] : vector<32x128xf32> to vector<128xf32>
    %79 = vector.shape_cast %78 : vector<128xf32> to vector<1x128xf32>
    %cst_60 = arith.constant 0.001953125 : f32
    %80 = vector.broadcast %cst_60 : f32 to vector<1x128xf32>
    %81 = arith.mulf %79, %80 : vector<1x128xf32>
    %cst_61 = arith.constant 9.99999974E-6 : f32
    %82 = vector.broadcast %cst_61 : f32 to vector<1x128xf32>
    %83 = arith.addf %81, %82 : vector<1x128xf32>
    %84 = math.rsqrt %83 : vector<1x128xf32>
    %c0_62 = arith.constant 0 : index
    %c0_63 = arith.constant 0 : index
    %85 = vector.load %arg5[%c0_62, %c0_63] : memref<1x128xf32, #tpu.memory_space<vmem>>, vector<1x128xf32>
    %86 = arith.mulf %84, %85 : vector<1x128xf32>
    %87 = vector.broadcast %86 : vector<1x128xf32> to vector<32x128xf32>
    %88 = arith.mulf %74, %87 : vector<32x128xf32>
    %c0_64 = arith.constant 0 : index
    %c0_65 = arith.constant 0 : index
    %89 = vector.load %arg6[%c0_64, %c0_65] : memref<1x128xf32, #tpu.memory_space<vmem>>, vector<1x128xf32>
    %90 = vector.broadcast %89 : vector<1x128xf32> to vector<32x128xf32>
    %91 = arith.addf %88, %90 : vector<32x128xf32>
    %c0_66 = arith.constant 0 : index
    %c0_67 = arith.constant 0 : index
    %c0_68 = arith.constant 0 : index
    %92 = vector.load %arg0[%c0_66, %c0_67, %c0_68] : memref<2x16x128xf32, #tpu.memory_space<vmem>>, vector<2x16x128xf32>
    %93 = vector.shape_cast %92 : vector<2x16x128xf32> to vector<32x128xf32>
    %94 = arith.addf %91, %93 : vector<32x128xf32>
    %cst_69 = arith.constant 0.000000e+00 : f32
    %95 = vector.broadcast %cst_69 : f32 to vector<32x128xf32>
    %96 = arith.maximumf %94, %95 : vector<32x128xf32>
    %c0_70 = arith.constant 0 : index
    %c0_71 = arith.constant 0 : index
    %97 = vector.load %arg8[%c0_70, %c0_71] : memref<32x128xf32, #tpu.memory_space<vmem>>, vector<32x128xf32>
    tpu.vector_store %arg8[%c0_70, %c0_71], %96 {strides = array<i32>} : memref<32x128xf32, #tpu.memory_space<vmem>>, vector<32x128xf32>,
    return
  }
}

</mosaic_0001>

<llo_original>
// kernel: tpu_custom_call.1
$region0: #{tpu_custom_call.1}
  #allocation0 [shape = 'u32[]', space=smem, size = 0x4, offset = 0x4, fixed_abs, tag = 'smem constant byte address 0x4 - core index']
  #allocation1 [shape = 'u32[144,128]{1,0:T(1,128)}', space=vmem, size = 0x12000, scoped, tag = 'internal scratch']
  #allocation2 [shape = 'bf16[2,18,144]{2,1,0:T(8,128)(2,1)}', space=vmem, size = 0x6000, scoped, tag = 'scratch operand']
  #allocation3 [shape = 'bf16[2,18,144]{2,1,0:T(8,128)(2,1)}', space=vmem, size = 0x6000, scoped, tag = 'scratch operand']
  %s0 = inlined_call_operand.hbm [shape: f32[2,16,128], index: 0, kind: input, shape index: {}]
  %s1 = inlined_call_operand.hbm [shape: bf16[432,128], index: 1, kind: input, shape index: {}]
  %s2 = inlined_call_operand.hbm [shape: bf16[432,128], index: 2, kind: input, shape index: {}]
  %s3 = inlined_call_operand.vmem [shape: f32[1,128], index: 3, kind: input, shape index: {}]
  %s4 = inlined_call_operand.vmem [shape: f32[1,128], index: 4, kind: input, shape index: {}]
  %s5 = inlined_call_operand.vmem [shape: f32[1,128], index: 5, kind: input, shape index: {}]
  %s6 = inlined_call_operand.vmem [shape: f32[1,128], index: 6, kind: input, shape index: {}]
  %s7 = inlined_call_operand.hbm [shape: f32[128,128], index: 7, kind: input, shape index: {}]
  %s8 = inlined_call_operand.hbm [shape: f32[32,128], index: 8, kind: output, shape index: {}]
  %s9 = sld [smem:[#allocation0]]
  $region58: #{tpu_custom_call.1} parent=0
    _
  %s11 = ssub.s32 1, %s9
  %s12 = scalar_select 0, %s11, %s9
  $region1: #{tpu_custom_call.1} parent=0
    #allocation4 [shape = 'u8[16384]{0}', space=vmem, size = 0x4000, scoped, tag = 'input window, operand 0, single buffered']
    #allocation5 [shape = 's32[1]{0}', space=sflag, size = 0x4, scoped, tag = 'scoped memory for tpu_custom_call.1']
    #allocation6 [shape = 's32[1]{0}', space=sflag, size = 0x4, scoped, tag = 'scoped memory for tpu_custom_call.1']
    #allocation7 [shape = 'u8[110592]{0}', space=vmem, size = 0x1b000, scoped, tag = 'input window, operand 1, single buffered']
    #allocation8 [shape = 's32[1]{0}', space=sflag, size = 0x4, scoped, tag = 'scoped memory for tpu_custom_call.1']
    #allocation9 [shape = 'u8[110592]{0}', space=vmem, size = 0x1b000, scoped, tag = 'input window, operand 2, single buffered']
    #allocation10 [shape = 'u8[65536]{0}', space=vmem, size = 0x10000, scoped, tag = 'input window, operand 7, single buffered']
    #allocation11 [shape = 's32[1]{0}', space=sflag, size = 0x4, scoped, tag = 'scoped memory for tpu_custom_call.1']
    #allocation12 [shape = 'u8[16384]{0}', space=vmem, size = 0x4000, scoped, tag = 'output window, operand 0, single buffered']
    %13 = vsyncpa [#allocation5], 0
    %14 = vsyncpa [#allocation8], 0
    %15 = vsyncpa [#allocation11], 0
    %16 = vsyncpa [#allocation6], 0
    // Predicated region
    $region2: #{tpu_custom_call.1} parent=1 // pred_check
      _
    $region3: #{tpu_custom_call.1} parent=1 // pred_check_branch
      %18 = sbr.rel (0) target = $region5
    $region4: #{tpu_custom_call.1} parent=1 // pred_region
      %s20 = ssub.s32 512, 512
      %21 = vsyncadd [#allocation5], %s20
      %s22 = sshll.u32 [#allocation4], 4
      %s23 = int_to_ptr.vmem [resolvable:$true] %s22
      %28 = dma.hbm_to_vmem [thread:$0]  %s0, 512, %s23, [#allocation5], 128, 128, 8
    $region5: #{tpu_custom_call.1} parent=1 // pred_fallthru
      _
    // Predicated region
    $region6: #{tpu_custom_call.1} parent=1 // pred_check
      _
    $region7: #{tpu_custom_call.1} parent=1 // pred_check_branch
      %30 = sbr.rel (0) target = $region9
    $region8: #{tpu_custom_call.1} parent=1 // pred_region
      %s32 = ssub.s32 3456, 3456
      %33 = vsyncadd [#allocation8], %s32
      %s34 = sshll.u32 [#allocation7], 4
      %s35 = int_to_ptr.vmem [resolvable:$true] %s34
      %40 = dma.hbm_to_vmem [thread:$0]  %s1, 3456, %s35, [#allocation8], 64, 64, 4
    $region9: #{tpu_custom_call.1} parent=1 // pred_fallthru
      _
    // Predicated region
    $region10: #{tpu_custom_call.1} parent=1 // pred_check
      _
    $region11: #{tpu_custom_call.1} parent=1 // pred_check_branch
      %42 = sbr.rel (0) target = $region13
    $region12: #{tpu_custom_call.1} parent=1 // pred_region
      %s44 = ssub.s32 3456, 3456
      %45 = vsyncadd [#allocation8], %s44
      %s46 = sshll.u32 [#allocation9], 4
      %s47 = int_to_ptr.vmem [resolvable:$true] %s46
      %52 = dma.hbm_to_vmem [thread:$0]  %s2, 3456, %s47, [#allocation8], 64, 64, 4
    $region13: #{tpu_custom_call.1} parent=1 // pred_fallthru
      _
    // Predicated region
    $region14: #{tpu_custom_call.1} parent=1 // pred_check
      _
    $region15: #{tpu_custom_call.1} parent=1 // pred_check_branch
      %54 = sbr.rel (0) target = $region17
    $region16: #{tpu_custom_call.1} parent=1 // pred_region
      _
    $region17: #{tpu_custom_call.1} parent=1 // pred_fallthru
      _
    // Predicated region
    $region18: #{tpu_custom_call.1} parent=1 // pred_check
      _
    $region19: #{tpu_custom_call.1} parent=1 // pred_check_branch
      %56 = sbr.rel (0) target = $region21
    $region20: #{tpu_custom_call.1} parent=1 // pred_region
      _
    $region21: #{tpu_custom_call.1} parent=1 // pred_fallthru
      _
    // Predicated region
    $region22: #{tpu_custom_call.1} parent=1 // pred_check
      _
    $region23: #{tpu_custom_call.1} parent=1 // pred_check_branch
      %58 = sbr.rel (0) target = $region25
    $region24: #{tpu_custom_call.1} parent=1 // pred_region
      _
    $region25: #{tpu_custom_call.1} parent=1 // pred_fallthru
      _
    // Predicated region
    $region26: #{tpu_custom_call.1} parent=1 // pred_check
      _
    $region27: #{tpu_custom_call.1} parent=1 // pred_check_branch
      %60 = sbr.rel (0) target = $region29
    $region28: #{tpu_custom_call.1} parent=1 // pred_region
      _
    $region29: #{tpu_custom_call.1} parent=1 // pred_fallthru
      _
    // Predicated region
    $region30: #{tpu_custom_call.1} parent=1 // pred_check
      _
    $region31: #{tpu_custom_call.1} parent=1 // pred_check_branch
      %62 = sbr.rel (0) target = $region33
    $region32: #{tpu_custom_call.1} parent=1 // pred_region
      %s64 = ssub.s32 2048, 2048
      %65 = vsyncadd [#allocation11], %s64
      %s66 = sshll.u32 [#allocation10], 4
      %s67 = int_to_ptr.vmem [resolvable:$true] %s66
      %72 = dma.hbm_to_vmem [thread:$0]  %s7, 2048, %s67, [#allocation11], 128, 128, 8
    $region33: #{tpu_custom_call.1} parent=1 // pred_fallthru
      _
    // Predicated region
    $region34: #{tpu_custom_call.1} parent=1 // pred_check
      _
    $region35: #{tpu_custom_call.1} parent=1 // pred_check_branch
      %74 = sbr.rel (0) target = $region37
    $region36: #{tpu_custom_call.1} parent=1 // pred_region
      %75 = dma.done [#allocation5], 512
    $region37: #{tpu_custom_call.1} parent=1 // pred_fallthru
      _
    // Predicated region
    $region38: #{tpu_custom_call.1} parent=1 // pred_check
      _
    $region39: #{tpu_custom_call.1} parent=1 // pred_check_branch
      %77 = sbr.rel (0) target = $region41
    $region40: #{tpu_custom_call.1} parent=1 // pred_region
      %78 = dma.done [#allocation8], 3456
    $region41: #{tpu_custom_call.1} parent=1 // pred_fallthru
      _
    // Predicated region
    $region42: #{tpu_custom_call.1} parent=1 // pred_check
      _
    $region43: #{tpu_custom_call.1} parent=1 // pred_check_branch
      %80 = sbr.rel (0) target = $region45
    $region44: #{tpu_custom_call.1} parent=1 // pred_region
      %81 = dma.done [#allocation8], 3456
    $region45: #{tpu_custom_call.1} parent=1 // pred_fallthru
      _
    // Predicated region
    $region46: #{tpu_custom_call.1} parent=1 // pred_check
      _
    $region47: #{tpu_custom_call.1} parent=1 // pred_check_branch
      %83 = sbr.rel (0) target = $region49
    $region48: #{tpu_custom_call.1} parent=1 // pred_region
      %84 = dma.done [#allocation11], 2048
    $region49: #{tpu_custom_call.1} parent=1 // pred_fallthru
      _
    %v86 = vld [vmem:[#allocation4] sm:$0xff]
    %v87 = vld [vmem:[#allocation4 + $0x8] sm:$0xff]
    %v88 = vld [vmem:[#allocation4 + $0x10] sm:$0xff]
    %v89 = vld [vmem:[#allocation4 + $0x18] sm:$0xff]
    %vm90 = vcmask 1043456
    %vm91 = vcmask 130052
    %vm92 = vmor %vm91, %vm90
    %93 = vst.msk [vmem:[#allocation2] sm:$0xff] %vm92, 0
    %94 = vst.msk [vmem:[#allocation2 + $0x8] sm:$0xff] %vm92, 0
    %vm95 = vcmask 1040384
    %vm96 = vcmask 126980
    %vm97 = vmor %vm96, %vm95
    %98 = vst.msk [vmem:[#allocation2 + $0x10] sm:$0x11] %vm97, 0
    %99 = vst.msk [vmem:[#allocation2 + $0x18] sm:$0xff] %vm92, 0
    %100 = vst.msk [vmem:[#allocation2 + $0x20] sm:$0xff] %vm92, 0
    %101 = vst.msk [vmem:[#allocation2 + $0x28] sm:$0x11] %vm97, 0
    %v102 = vpack.c.bf16 %v87, %v86
    %v103 = vpack.c.bf16 %v89, %v88
    %v106 = vunpack.c.l.b16 %v102
    %v107 = vunpack.c.h.b16 %v102
    %v108 = vunpack.c.l.b16 %v103
    %v109 = vunpack.c.h.b16 %v103
    %v110 = vpack.c.b16 %v106, %v106
    %v111 = vpack.c.b16 %v107, %v107
    %v112 = vpack.c.b16 %v108, %v108
    %v113 = vpack.c.b16 %v109, %v109
    %vm114 = vsmask.f32 256
    %vm115 = vsmask.f32 4368
    %vm116 = vmor %vm114, %vm115
    %v118 = vshrl.u32 %v110, 16
    %v120 = vrot.slane %v118, 7
    %v121 = vshll.u32 %v110, 16
    %v123 = vor.u32 %v120, %v121
    %v124 = vrot.slane %v120, 4
    %v126 = vshrl.u32 %v111, 16
    %v128 = vrot.slane %v126, 7
    %v129 = vshll.u32 %v111, 16
    %v131 = vor.u32 %v128, %v129
    %v132 = vsel %vm116, %v124, %v131
    %v133 = vrot.slane %v128, 4
    %v135 = vshrl.u32 %v112, 16
    %v137 = vrot.slane %v135, 7
    %v138 = vshll.u32 %v112, 16
    %v140 = vor.u32 %v137, %v138
    %v141 = vrot.slane %v137, 4
    %v143 = vshrl.u32 %v113, 16
    %v145 = vrot.slane %v143, 7
    %v146 = vshll.u32 %v113, 16
    %v148 = vor.u32 %v145, %v146
    %v149 = vsel %vm116, %v141, %v148
    %v150 = vrot.slane %v145, 4
    %151 = vrot.lane.b32.xlu0 %v123, 8
    %v152 = vpop.permute.xlu0 %151
    %153 = vrot.lane.b32.xlu0 %v132, 8
    %v154 = vpop.permute.xlu0 %153
    %155 = vrot.lane.b32.xlu0 %v133, 8
    %v156 = vpop.permute.xlu0 %155
    %157 = vrot.lane.b32.xlu0 %v140, 8
    %v158 = vpop.permute.xlu0 %157
    %159 = vrot.lane.b32.xlu0 %v149, 8
    %v160 = vpop.permute.xlu0 %159
    %161 = vrot.lane.b32.xlu0 %v150, 8
    %v162 = vpop.permute.xlu0 %161
    %v163 = vrot.slane %v152, 4
    %v164 = vrot.slane %v154, 4
    %v165 = vrot.slane %v156, 4
    %v166 = vrot.slane %v158, 4
    %v167 = vrot.slane %v160, 4
    %v168 = vrot.slane %v162, 4
    %vm169 = vcmask 64512
    %v170 = vsel %vm169, %v163, %v152
    %v171 = vsel %vm169, %v164, %v154
    %v172 = vsel %vm169, %v165, %v156
    %v173 = vsel %vm169, %v166, %v158
    %v174 = vsel %vm169, %v167, %v160
    %v175 = vsel %vm169, %v168, %v162
    %vm182 = vcmask 1043520
    %vm183 = vsmask.f32 7938
    %vm184 = vmand %vm182, %vm183
    %vm185 = vcmask 64516
    %vm186 = vsmask.f32 7954
    %vm187 = vmand %vm185, %vm186
    %vm188 = vmor %vm187, %vm184
    %v189 = vld [vmem:[#allocation2] sm:$0xff]
    %v190 = vsel %vm188, %v170, %v189
    %191 = vst [vmem:[#allocation2] sm:$0xff] %v190
    %vm192 = vcmask 1043520
    %vm193 = vcmask 64516
    %vm194 = vmor %vm193, %vm192
    %195 = vst.msk [vmem:[#allocation2 + $0x8] sm:$0xff] %vm194, %v171
    %vm196 = vcmask 1040448
    %vm197 = vmand %vm196, %vm114
    %vm198 = vcmask 61444
    %vm199 = vsmask.f32 4352
    %vm200 = vmand %vm198, %vm199
    %vm201 = vmor %vm200, %vm197
    %v202 = vld [vmem:[#allocation2 + $0x10] sm:$0x11]
    %v203 = vsel %vm201, %v172, %v202
    %204 = vst [vmem:[#allocation2 + $0x10] sm:$0x11] %v203
    %v205 = vld [vmem:[#allocation2 + $0x18] sm:$0xff]
    %v206 = vsel %vm188, %v173, %v205
    %207 = vst [vmem:[#allocation2 + $0x18] sm:$0xff] %v206
    %208 = vst.msk [vmem:[#allocation2 + $0x20] sm:$0xff] %vm194, %v174
    %v209 = vld [vmem:[#allocation2 + $0x28] sm:$0x11]
    %v210 = vsel %vm201, %v175, %v209
    %211 = vst [vmem:[#allocation2 + $0x28] sm:$0x11] %v210
    %v212 = vld [vmem:[#allocation2] sm:$0xff]
    %v213 = vld [vmem:[#allocation2 + $0x8] sm:$0xff]
    %v214 = vld [vmem:[#allocation2 + $0x10] sm:$0x11]
    %v215 = vld [vmem:[#allocation2 + $0x18] sm:$0xff]
    %v216 = vld [vmem:[#allocation2 + $0x20] sm:$0xff]
    %v217 = vld [vmem:[#allocation2 + $0x28] sm:$0x11]
    %v218 = vld [vmem:[#allocation7] sm:$0xf]
    %v219 = vld [vmem:[#allocation7 + $0x4] sm:$0xf]
    %v220 = vld [vmem:[#allocation7 + $0x8] sm:$0xf]
    %v221 = vld [vmem:[#allocation7 + $0xc] sm:$0xf]
    %v222 = vld [vmem:[#allocation7 + $0x10] sm:$0xf]
    %v223 = vld [vmem:[#allocation7 + $0x14] sm:$0xf]
    %v224 = vld [vmem:[#allocation7 + $0x18] sm:$0xf]
    %v225 = vld [vmem:[#allocation7 + $0x1c] sm:$0xf]
    %v226 = vld [vmem:[#allocation7 + $0x20] sm:$0xf]
    %v227 = vld [vmem:[#allocation7 + $0x24] sm:$0xf]
    %v228 = vld [vmem:[#allocation7 + $0x28] sm:$0xf]
    %v229 = vld [vmem:[#allocation7 + $0x2c] sm:$0xf]
    %v230 = vld [vmem:[#allocation7 + $0x30] sm:$0xf]
    %v231 = vld [vmem:[#allocation7 + $0x34] sm:$0xf]
    %v232 = vld [vmem:[#allocation7 + $0x38] sm:$0xf]
    %v233 = vld [vmem:[#allocation7 + $0x3c] sm:$0xf]
    %v234 = vld [vmem:[#allocation7 + $0x40] sm:$0xf]
    %v235 = vld [vmem:[#allocation7 + $0x44] sm:$0xf]
    %vm236 = vsmask.f32 3328
    %vm237 = vsmask.f32 7440
    %vm238 = vmor %vm236, %vm237
    %v240 = vshrl.u32 %v212, 16
    %v242 = vrot.slane %v240, 4
    %v243 = vshll.u32 %v212, 16
    %v245 = vrot.slane %v243, 5
    %v246 = vor.u32 %v242, %v245
    %v247 = vrot.slane %v246, 4
    %v249 = vshll.u32 %v213, 16
    %v251 = vrot.slane %v249, 5
    %v252 = vsel %vm238, %v247, %v251
    %v253 = vshrl.u32 %v213, 16
    %v255 = vrot.slane %v253, 4
    %v256 = vor.u32 %v255, %v251
    %v257 = vrot.slane %v256, 4
    %v259 = vshll.u32 %v214, 16
    %v261 = vrot.slane %v259, 5
    %v262 = vsel %vm238, %v257, %v261
    %v264 = vshrl.u32 %v215, 16
    %v266 = vrot.slane %v264, 4
    %v267 = vshll.u32 %v215, 16
    %v269 = vrot.slane %v267, 5
    %v270 = vor.u32 %v266, %v269
    %v271 = vrot.slane %v270, 4
    %v273 = vshll.u32 %v216, 16
    %v275 = vrot.slane %v273, 5
    %v276 = vsel %vm238, %v271, %v275
    %v277 = vshrl.u32 %v216, 16
    %v279 = vrot.slane %v277, 4
    %v280 = vor.u32 %v279, %v275
    %v281 = vrot.slane %v280, 4
    %v283 = vshll.u32 %v217, 16
    %v285 = vrot.slane %v283, 5
    %v286 = vsel %vm238, %v281, %v285
    %v287 = vld [vmem:[#allocation7 + $0x48] sm:$0xf]
    %v288 = vld [vmem:[#allocation7 + $0x4c] sm:$0xf]
    %v289 = vld [vmem:[#allocation7 + $0x50] sm:$0xf]
    %v290 = vld [vmem:[#allocation7 + $0x54] sm:$0xf]
    %v291 = vld [vmem:[#allocation7 + $0x58] sm:$0xf]
    %v292 = vld [vmem:[#allocation7 + $0x5c] sm:$0xf]
    %v293 = vld [vmem:[#allocation7 + $0x60] sm:$0xf]
    %v294 = vld [vmem:[#allocation7 + $0x64] sm:$0xf]
    %v295 = vld [vmem:[#allocation7 + $0x68] sm:$0xf]
    %v296 = vld [vmem:[#allocation7 + $0x6c] sm:$0xf]
    %v297 = vld [vmem:[#allocation7 + $0x70] sm:$0xf]
    %v298 = vld [vmem:[#allocation7 + $0x74] sm:$0xf]
    %v299 = vld [vmem:[#allocation7 + $0x78] sm:$0xf]
    %v300 = vld [vmem:[#allocation7 + $0x7c] sm:$0xf]
    %v301 = vld [vmem:[#allocation7 + $0x80] sm:$0xf]
    %v302 = vld [vmem:[#allocation7 + $0x84] sm:$0xf]
    %v303 = vld [vmem:[#allocation7 + $0x88] sm:$0xf]
    %v304 = vld [vmem:[#allocation7 + $0x8c] sm:$0xf]
    %v305 = vunpack.c.l.b16 %v252
    %v306 = vunpack.c.h.b16 %v252
    %v307 = vunpack.c.l.b16 %v262
    %v308 = vunpack.c.h.b16 %v262
    %v309 = vunpack.c.l.b16 %v276
    %v310 = vunpack.c.h.b16 %v276
    %v311 = vunpack.c.l.b16 %v286
    %v312 = vunpack.c.h.b16 %v286
    %v313 = vpack.c.b16 %v307, %v305
    %v314 = vpack.c.b16 %v308, %v306
    %v315 = vpack.c.b16 %v311, %v309
    %v316 = vpack.c.b16 %v312, %v310
    %v337 = vunpack.c.l.b16 %v287
    %v338 = vunpack.c.l.b16 %v288
    %v339 = vunpack.c.l.b16 %v289
    %v340 = vunpack.c.l.b16 %v290
    %v341 = vunpack.c.l.b16 %v291
    %v342 = vunpack.c.l.b16 %v292
    %v343 = vunpack.c.l.b16 %v293
    %v344 = vunpack.c.l.b16 %v294
    %v345 = vunpack.c.l.b16 %v295
    %v346 = vunpack.c.l.b16 %v296
    %v347 = vunpack.c.l.b16 %v297
    %v348 = vunpack.c.l.b16 %v298
    %v349 = vunpack.c.l.b16 %v299
    %v350 = vunpack.c.l.b16 %v300
    %v351 = vunpack.c.l.b16 %v301
    %v352 = vunpack.c.l.b16 %v302
    %v353 = vunpack.c.l.b16 %v303
    %v354 = vunpack.c.l.b16 %v304
    %v355 = vpack.c.b16 %v338, %v337
    %v356 = vpack.c.b16 %v340, %v339
    %v357 = vpack.c.b16 %v342, %v341
    %v358 = vpack.c.b16 %v344, %v343
    %v359 = vpack.c.b16 %v346, %v345
    %v360 = vpack.c.b16 %v348, %v347
    %v361 = vpack.c.b16 %v350, %v349
    %v362 = vpack.c.b16 %v352, %v351
    %v363 = vpack.c.b16 %v354, %v353
    %vm373 = vcmask 130048
    %v375 = vsel %vm373, %v314, 0
    %v378 = vsel %vm373, %v316, 0
    %380 = vmatprep.subr.bf16.mxu0 0
    %381 = vmatpush1.bf16.msra.mxu0 %v355
    %382 = vmatprep.subr.bf16.mxu0 0
    %383 = vmatpush1.bf16.msra.mxu0 %v356
    %384 = vmatprep.subr.bf16.mxu0 0
    %385 = vmatpush1.bf16.msra.mxu0 %v357
    %386 = vmatprep.subr.bf16.mxu0 0
    %387 = vmatpush1.bf16.msra.mxu0 %v358
    %388 = vmatprep.subr.bf16.mxu0 0
    %389 = vmatpush1.bf16.msra.mxu0 %v359
    %390 = vmatprep.subr.bf16.mxu0 0
    %391 = vmatpush1.bf16.msra.mxu0 %v360
    %392 = vmatprep.subr.bf16.mxu0 0
    %393 = vmatpush1.bf16.msra.mxu0 %v361
    %394 = vmatprep.subr.bf16.mxu0 0
    %395 = vmatpush1.bf16.msra.mxu0 %v362
    %396 = vmatprep.subr.bf16.mxu0 0
    %397 = vmatpush1.bf16.msra.mxu0 %v363
    %398 = vmatprep.subr.bf16.mxu0 0
    %399 = vmatpush1.bf16.msra.mxu0 0
    %400 = vmatprep.subr.bf16.mxu0 0
    %401 = vmatpush1.bf16.msra.mxu0 0
    %402 = vmatprep.subr.bf16.mxu0 0
    %403 = vmatpush1.bf16.msra.mxu0 0
    %404 = vmatprep.subr.bf16.mxu0 0
    %405 = vmatpush1.bf16.msra.mxu0 0
    %406 = vmatprep.subr.bf16.mxu0 0
    %407 = vmatpush1.bf16.msra.mxu0 0
    %408 = vmatprep.subr.bf16.mxu0 0
    %409 = vmatpush1.bf16.msra.mxu0 0
    %410 = vmatprep.subr.bf16.mxu0 0
    %411 = vmatpush1.bf16.msra.mxu0 0
    %412 = vmatprep.mubr.bf16.mxu0 %v375
    %413 = vmatmul.mubr.bf16.gmra.mrb[0].mxu0 %v313
    %v414 = vpop.f32.mrb[0].mxu0
    %v415 = vadd.f32 0.0, %v414
    %v416 = vpop.f32.mrb[0].mxu0
    %v417 = vpop.f32.mrb[0].mxu0
    %v418 = vadd.f32 0.0, %v417
    %v419 = vpop.f32.mrb[0].mxu0
    %420 = vmatprep.mubr.bf16.mxu0 %v378
    %421 = vmatmul.mubr.bf16.gmra.mrb[0].mxu0 %v315
    %v422 = vpop.f32.mrb[0].mxu0
    %v423 = vadd.f32 0.0, %v422
    %v424 = vpop.f32.mrb[0].mxu0
    %v425 = vpop.f32.mrb[0].mxu0
    %v426 = vadd.f32 0.0, %v425
    %v427 = vpop.f32.mrb[0].mxu0
    %428 = vdwg.mxu0
    %v433 = vunpack.c.l.b16 %v212
    %v434 = vunpack.c.h.b16 %v212
    %v435 = vunpack.c.l.b16 %v213
    %v436 = vunpack.c.h.b16 %v213
    %v437 = vunpack.c.l.b16 %v215
    %v438 = vunpack.c.h.b16 %v215
    %v439 = vunpack.c.l.b16 %v216
    %v440 = vunpack.c.h.b16 %v216
    %v441 = vpack.c.b16 %v435, %v433
    %v442 = vpack.c.b16 %v436, %v434
    %v443 = vpack.c.b16 %v439, %v437
    %v444 = vpack.c.b16 %v440, %v438
    %v465 = vunpack.c.l.b16 %v218
    %v466 = vunpack.c.l.b16 %v219
    %v467 = vunpack.c.l.b16 %v220
    %v468 = vunpack.c.l.b16 %v221
    %v469 = vunpack.c.l.b16 %v222
    %v470 = vunpack.c.l.b16 %v223
    %v471 = vunpack.c.l.b16 %v224
    %v472 = vunpack.c.l.b16 %v225
    %v473 = vunpack.c.l.b16 %v226
    %v474 = vunpack.c.l.b16 %v227
    %v475 = vunpack.c.l.b16 %v228
    %v476 = vunpack.c.l.b16 %v229
    %v477 = vunpack.c.l.b16 %v230
    %v478 = vunpack.c.l.b16 %v231
    %v479 = vunpack.c.l.b16 %v232
    %v480 = vunpack.c.l.b16 %v233
    %v481 = vunpack.c.l.b16 %v234
    %v482 = vunpack.c.l.b16 %v235
    %v483 = vpack.c.b16 %v466, %v465
    %v484 = vpack.c.b16 %v468, %v467
    %v485 = vpack.c.b16 %v470, %v469
    %v486 = vpack.c.b16 %v472, %v471
    %v487 = vpack.c.b16 %v474, %v473
    %v488 = vpack.c.b16 %v476, %v475
    %v489 = vpack.c.b16 %v478, %v477
    %v490 = vpack.c.b16 %v480, %v479
    %v491 = vpack.c.b16 %v482, %v481
    %v502 = vsel %vm373, %v442, 0
    %v505 = vsel %vm373, %v444, 0
    %507 = vmatprep.subr.bf16.mxu0 0
    %508 = vmatpush1.bf16.msra.mxu0 %v483
    %509 = vmatprep.subr.bf16.mxu0 0
    %510 = vmatpush1.bf16.msra.mxu0 %v484
    %511 = vmatprep.subr.bf16.mxu0 0
    %512 = vmatpush1.bf16.msra.mxu0 %v485
    %513 = vmatprep.subr.bf16.mxu0 0
    %514 = vmatpush1.bf16.msra.mxu0 %v486
    %515 = vmatprep.subr.bf16.mxu0 0
    %516 = vmatpush1.bf16.msra.mxu0 %v487
    %517 = vmatprep.subr.bf16.mxu0 0
    %518 = vmatpush1.bf16.msra.mxu0 %v488
    %519 = vmatprep.subr.bf16.mxu0 0
    %520 = vmatpush1.bf16.msra.mxu0 %v489
    %521 = vmatprep.subr.bf16.mxu0 0
    %522 = vmatpush1.bf16.msra.mxu0 %v490
    %523 = vmatprep.subr.bf16.mxu0 0
    %524 = vmatpush1.bf16.msra.mxu0 %v491
    %525 = vmatprep.subr.bf16.mxu0 0
    %526 = vmatpush1.bf16.msra.mxu0 0
    %527 = vmatprep.subr.bf16.mxu0 0
    %528 = vmatpush1.bf16.msra.mxu0 0
    %529 = vmatprep.subr.bf16.mxu0 0
    %530 = vmatpush1.bf16.msra.mxu0 0
    %531 = vmatprep.subr.bf16.mxu0 0
    %532 = vmatpush1.bf16.msra.mxu0 0
    %533 = vmatprep.subr.bf16.mxu0 0
    %534 = vmatpush1.bf16.msra.mxu0 0
    %535 = vmatprep.subr.bf16.mxu0 0
    %536 = vmatpush1.bf16.msra.mxu0 0
    %537 = vmatprep.subr.bf16.mxu0 0
    %538 = vmatpush1.bf16.msra.mxu0 0
    %539 = vmatprep.mubr.bf16.mxu0 %v502
    %540 = vmatmul.mubr.bf16.gmra.mrb[0].mxu0 %v441
    %v541 = vpop.f32.mrb[0].mxu0
    %v542 = vadd.f32 %v415, %v541
    %v543 = vpop.f32.mrb[0].mxu0
    %v544 = vpop.f32.mrb[0].mxu0
    %v545 = vadd.f32 %v418, %v544
    %v546 = vpop.f32.mrb[0].mxu0
    %547 = vmatprep.mubr.bf16.mxu0 %v505
    %548 = vmatmul.mubr.bf16.gmra.mrb[0].mxu0 %v443
    %v549 = vpop.f32.mrb[0].mxu0
    %v550 = vadd.f32 %v423, %v549
    %v551 = vpop.f32.mrb[0].mxu0
    %v552 = vpop.f32.mrb[0].mxu0
    %v553 = vadd.f32 %v426, %v552
    %v554 = vpop.f32.mrb[0].mxu0
    %555 = vdwg.mxu0
    %vm558 = vcmask 1042432
    %vm559 = vcmask 1046532
    %vm560 = vmor %vm558, %vm559
    %v561 = vrot.slane %v212, 5
    %v562 = vrot.slane %v561, 4
    %v563 = vrot.slane %v213, 5
    %v564 = vsel %vm560, %v562, %v563
    %v565 = vrot.slane %v563, 4
    %v566 = vrot.slane %v214, 5
    %v567 = vsel %vm560, %v565, %v566
    %v568 = vrot.slane %v215, 5
    %v569 = vrot.slane %v568, 4
    %v570 = vrot.slane %v216, 5
    %v571 = vsel %vm560, %v569, %v570
    %v572 = vrot.slane %v570, 4
    %v573 = vrot.slane %v217, 5
    %v574 = vsel %vm560, %v572, %v573
    %v575 = vld [vmem:[#allocation7 + $0x90] sm:$0xf]
    %v576 = vld [vmem:[#allocation7 + $0x94] sm:$0xf]
    %v577 = vld [vmem:[#allocation7 + $0x98] sm:$0xf]
    %v578 = vld [vmem:[#allocation7 + $0x9c] sm:$0xf]
    %v579 = vld [vmem:[#allocation7 + $0xa0] sm:$0xf]
    %v580 = vld [vmem:[#allocation7 + $0xa4] sm:$0xf]
    %v581 = vld [vmem:[#allocation7 + $0xa8] sm:$0xf]
    %v582 = vld [vmem:[#allocation7 + $0xac] sm:$0xf]
    %v583 = vld [vmem:[#allocation7 + $0xb0] sm:$0xf]
    %v584 = vld [vmem:[#allocation7 + $0xb4] sm:$0xf]
    %v585 = vld [vmem:[#allocation7 + $0xb8] sm:$0xf]
    %v586 = vld [vmem:[#allocation7 + $0xbc] sm:$0xf]
    %v587 = vld [vmem:[#allocation7 + $0xc0] sm:$0xf]
    %v588 = vld [vmem:[#allocation7 + $0xc4] sm:$0xf]
    %v589 = vld [vmem:[#allocation7 + $0xc8] sm:$0xf]
    %v590 = vld [vmem:[#allocation7 + $0xcc] sm:$0xf]
    %v591 = vld [vmem:[#allocation7 + $0xd0] sm:$0xf]
    %v592 = vld [vmem:[#allocation7 + $0xd4] sm:$0xf]
    %v593 = vunpack.c.l.b16 %v564
    %v594 = vunpack.c.h.b16 %v564
    %v595 = vunpack.c.l.b16 %v567
    %v596 = vunpack.c.h.b16 %v567
    %v597 = vunpack.c.l.b16 %v571
    %v598 = vunpack.c.h.b16 %v571
    %v599 = vunpack.c.l.b16 %v574
    %v600 = vunpack.c.h.b16 %v574
    %v601 = vpack.c.b16 %v595, %v593
    %v602 = vpack.c.b16 %v596, %v594
    %v603 = vpack.c.b16 %v599, %v597
    %v604 = vpack.c.b16 %v600, %v598
    %v625 = vunpack.c.l.b16 %v575
    %v626 = vunpack.c.l.b16 %v576
    %v627 = vunpack.c.l.b16 %v577
    %v628 = vunpack.c.l.b16 %v578
    %v629 = vunpack.c.l.b16 %v579
    %v630 = vunpack.c.l.b16 %v580
    %v631 = vunpack.c.l.b16 %v581
    %v632 = vunpack.c.l.b16 %v582
    %v633 = vunpack.c.l.b16 %v583
    %v634 = vunpack.c.l.b16 %v584
    %v635 = vunpack.c.l.b16 %v585
    %v636 = vunpack.c.l.b16 %v586
    %v637 = vunpack.c.l.b16 %v587
    %v638 = vunpack.c.l.b16 %v588
    %v639 = vunpack.c.l.b16 %v589
    %v640 = vunpack.c.l.b16 %v590
    %v641 = vunpack.c.l.b16 %v591
    %v642 = vunpack.c.l.b16 %v592
    %v643 = vpack.c.b16 %v626, %v625
    %v644 = vpack.c.b16 %v628, %v627
    %v645 = vpack.c.b16 %v630, %v629
    %v646 = vpack.c.b16 %v632, %v631
    %v647 = vpack.c.b16 %v634, %v633
    %v648 = vpack.c.b16 %v636, %v635
    %v649 = vpack.c.b16 %v638, %v637
    %v650 = vpack.c.b16 %v640, %v639
    %v651 = vpack.c.b16 %v642, %v641
    %v662 = vsel %vm373, %v602, 0
    %v665 = vsel %vm373, %v604, 0
    %667 = vmatprep.subr.bf16.mxu0 0
    %668 = vmatpush1.bf16.msra.mxu0 %v643
    %669 = vmatprep.subr.bf16.mxu0 0
    %670 = vmatpush1.bf16.msra.mxu0 %v644
    %671 = vmatprep.subr.bf16.mxu0 0
    %672 = vmatpush1.bf16.msra.mxu0 %v645
    %673 = vmatprep.subr.bf16.mxu0 0
    %674 = vmatpush1.bf16.msra.mxu0 %v646
    %675 = vmatprep.subr.bf16.mxu0 0
    %676 = vmatpush1.bf16.msra.mxu0 %v647
    %677 = vmatprep.subr.bf16.mxu0 0
    %678 = vmatpush1.bf16.msra.mxu0 %v648
    %679 = vmatprep.subr.bf16.mxu0 0
    %680 = vmatpush1.bf16.msra.mxu0 %v649
    %681 = vmatprep.subr.bf16.mxu0 0
    %682 = vmatpush1.bf16.msra.mxu0 %v650
    %683 = vmatprep.subr.bf16.mxu0 0
    %684 = vmatpush1.bf16.msra.mxu0 %v651
    %685 = vmatprep.subr.bf16.mxu0 0
    %686 = vmatpush1.bf16.msra.mxu0 0
    %687 = vmatprep.subr.bf16.mxu0 0
    %688 = vmatpush1.bf16.msra.mxu0 0
    %689 = vmatprep.subr.bf16.mxu0 0
    %690 = vmatpush1.bf16.msra.mxu0 0
    %691 = vmatprep.subr.bf16.mxu0 0
    %692 = vmatpush1.bf16.msra.mxu0 0
    %693 = vmatprep.subr.bf16.mxu0 0
    %694 = vmatpush1.bf16.msra.mxu0 0
    %695 = vmatprep.subr.bf16.mxu0 0
    %696 = vmatpush1.bf16.msra.mxu0 0
    %697 = vmatprep.subr.bf16.mxu0 0
    %698 = vmatpush1.bf16.msra.mxu0 0
    %699 = vmatprep.mubr.bf16.mxu0 %v662
    %700 = vmatmul.mubr.bf16.gmra.mrb[0].mxu0 %v601
    %v701 = vpop.f32.mrb[0].mxu0
    %v702 = vadd.f32 0.0, %v701
    %v703 = vpop.f32.mrb[0].mxu0
    %v704 = vpop.f32.mrb[0].mxu0
    %v705 = vadd.f32 0.0, %v704
    %v706 = vpop.f32.mrb[0].mxu0
    %707 = vmatprep.mubr.bf16.mxu0 %v665
    %708 = vmatmul.mubr.bf16.gmra.mrb[0].mxu0 %v603
    %v709 = vpop.f32.mrb[0].mxu0
    %v710 = vadd.f32 0.0, %v709
    %v711 = vpop.f32.mrb[0].mxu0
    %v712 = vpop.f32.mrb[0].mxu0
    %v713 = vadd.f32 0.0, %v712
    %v714 = vpop.f32.mrb[0].mxu0
    %715 = vdwg.mxu0
    %v716 = vadd.f32 %v542, %v702
    %v717 = vadd.f32 %v545, %v705
    %v718 = vadd.f32 %v550, %v710
    %v719 = vadd.f32 %v553, %v713
    %v720 = vld [vmem:[#allocation10] sm:$0xff]
    %v721 = vld [vmem:[#allocation10 + $0x8] sm:$0xff]
    %v722 = vld [vmem:[#allocation10 + $0x10] sm:$0xff]
    %v723 = vld [vmem:[#allocation10 + $0x18] sm:$0xff]
    %v724 = vld [vmem:[#allocation10 + $0x20] sm:$0xff]
    %v725 = vld [vmem:[#allocation10 + $0x28] sm:$0xff]
    %v726 = vld [vmem:[#allocation10 + $0x30] sm:$0xff]
    %v727 = vld [vmem:[#allocation10 + $0x38] sm:$0xff]
    %v728 = vld [vmem:[#allocation10 + $0x40] sm:$0xff]
    %v729 = vld [vmem:[#allocation10 + $0x48] sm:$0xff]
    %v730 = vld [vmem:[#allocation10 + $0x50] sm:$0xff]
    %v731 = vld [vmem:[#allocation10 + $0x58] sm:$0xff]
    %v732 = vld [vmem:[#allocation10 + $0x60] sm:$0xff]
    %v733 = vld [vmem:[#allocation10 + $0x68] sm:$0xff]
    %v734 = vld [vmem:[#allocation10 + $0x70] sm:$0xff]
    %v735 = vld [vmem:[#allocation10 + $0x78] sm:$0xff]
    %736 = vmatprep.subr.mxu0 0.0
    %737 = vmatpush1.msra.mxu0 %v720
    %738 = vmatprep.subr.mxu0 0.0
    %739 = vmatpush1.msra.mxu0 %v721
    %740 = vmatprep.subr.mxu0 0.0
    %741 = vmatpush1.msra.mxu0 %v722
    %742 = vmatprep.subr.mxu0 0.0
    %743 = vmatpush1.msra.mxu0 %v723
    %744 = vmatprep.subr.mxu0 0.0
    %745 = vmatpush1.msra.mxu0 %v724
    %746 = vmatprep.subr.mxu0 0.0
    %747 = vmatpush1.msra.mxu0 %v725
    %748 = vmatprep.subr.mxu0 0.0
    %749 = vmatpush1.msra.mxu0 %v726
    %750 = vmatprep.subr.mxu0 0.0
    %751 = vmatpush1.msra.mxu0 %v727
    %752 = vmatprep.subr.mxu0 0.0
    %753 = vmatpush1.msra.mxu0 %v728
    %754 = vmatprep.subr.mxu0 0.0
    %755 = vmatpush1.msra.mxu0 %v729
    %756 = vmatprep.subr.mxu0 0.0
    %757 = vmatpush1.msra.mxu0 %v730
    %758 = vmatprep.subr.mxu0 0.0
    %759 = vmatpush1.msra.mxu0 %v731
    %760 = vmatprep.subr.mxu0 0.0
    %761 = vmatpush1.msra.mxu0 %v732
    %762 = vmatprep.subr.mxu0 0.0
    %763 = vmatpush1.msra.mxu0 %v733
    %764 = vmatprep.subr.mxu0 0.0
    %765 = vmatpush1.msra.mxu0 %v734
    %766 = vmatprep.subr.mxu0 0.0
    %767 = vmatpush1.msra.mxu0 %v735
    %768 = vmatprep.subr.mxu0 0.0
    %769 = vmatpush1.msra.mxu0 0.0
    %770 = vmatprep.subr.mxu0 0.0
    %771 = vmatpush1.msra.mxu0 0.0
    %772 = vmatprep.subr.mxu0 0.0
    %773 = vmatpush1.msra.mxu0 0.0
    %774 = vmatprep.subr.mxu0 0.0
    %775 = vmatpush1.msra.mxu0 0.0
    %776 = vmatprep.subr.mxu0 0.0
    %777 = vmatpush1.msra.mxu0 0.0
    %778 = vmatprep.subr.mxu0 0.0
    %779 = vmatpush1.msra.mxu0 0.0
    %780 = vmatprep.subr.mxu0 0.0
    %781 = vmatpush1.msra.mxu0 0.0
    %782 = vmatprep.subr.mxu0 0.0
    %783 = vmatpush1.msra.mxu0 0.0
    %784 = vmatprep.subr.mxu0 0.0
    %785 = vmatpush1.msra.mxu0 0.0
    %786 = vmatprep.subr.mxu0 0.0
    %787 = vmatpush1.msra.mxu0 0.0
    %788 = vmatprep.subr.mxu0 0.0
    %789 = vmatpush1.msra.mxu0 0.0
    %790 = vmatprep.subr.mxu0 0.0
    %791 = vmatpush1.msra.mxu0 0.0
    %792 = vmatprep.subr.mxu0 0.0
    %793 = vmatpush1.msra.mxu0 0.0
    %794 = vmatprep.subr.mxu0 0.0
    %795 = vmatpush1.msra.mxu0 0.0
    %796 = vmatprep.subr.mxu0 0.0
    %797 = vmatpush1.msra.mxu0 0.0
    %798 = vmatprep.subr.mxu0 0.0
    %799 = vmatpush1.msra.mxu0 0.0
    %800 = vmatprep.mubr.f32.mxu0 0.0
    %801 = vmatmul.mubr.f32.gmra.mrb[0].mxu0 %v716
    %v802 = vpop.f32.mrb[0].mxu0
    %v803 = vadd.f32 0.0, %v802
    %v804 = vpop.f32.mrb[0].mxu0
    %805 = vmatprep.mubr.f32.mxu0 0.0
    %806 = vmatmul.mubr.f32.gmra.mrb[0].mxu0 %v717
    %v807 = vpop.f32.mrb[0].mxu0
    %v808 = vadd.f32 0.0, %v807
    %v809 = vpop.f32.mrb[0].mxu0
    %810 = vmatprep.mubr.f32.mxu0 0.0
    %811 = vmatmul.mubr.f32.gmra.mrb[0].mxu0 %v718
    %v812 = vpop.f32.mrb[0].mxu0
    %v813 = vadd.f32 0.0, %v812
    %v814 = vpop.f32.mrb[0].mxu0
    %815 = vmatprep.mubr.f32.mxu0 0.0
    %816 = vmatmul.mubr.f32.gmra.mrb[0].mxu0 %v719
    %v817 = vpop.f32.mrb[0].mxu0
    %v818 = vadd.f32 0.0, %v817
    %v819 = vpop.f32.mrb[0].mxu0
    %820 = vdwg.mxu0
    %v821 = vadd.f32 %v803, %v808
    %v822 = vadd.f32 %v821, %v813
    %v823 = vadd.f32 %v822, %v818
    %v824 = vrot.slane %v823, 4
    %v825 = vadd.f32 %v823, %v824
    %v826 = vrot.slane %v825, 2
    %v827 = vadd.f32 %v825, %v826
    %v828 = vrot.slane %v827, 1
    %v829 = vadd.f32 %v827, %v828
    %v830 = vmul.f32 %v829, 0.001953125
    %v831 = vsub.f32 %v716, %v830
    %v832 = vsub.f32 %v717, %v830
    %v833 = vsub.f32 %v718, %v830
    %v834 = vsub.f32 %v719, %v830
    %v835 = vmul.f32 %v831, %v831
    %v836 = vmul.f32 %v832, %v832
    %v837 = vmul.f32 %v833, %v833
    %v838 = vmul.f32 %v834, %v834
    %839 = vmatprep.subr.mxu0 0.0
    %840 = vmatpush1.msra.mxu0 %v720
    %841 = vmatprep.subr.mxu0 0.0
    %842 = vmatpush1.msra.mxu0 %v721
    %843 = vmatprep.subr.mxu0 0.0
    %844 = vmatpush1.msra.mxu0 %v722
    %845 = vmatprep.subr.mxu0 0.0
    %846 = vmatpush1.msra.mxu0 %v723
    %847 = vmatprep.subr.mxu0 0.0
    %848 = vmatpush1.msra.mxu0 %v724
    %849 = vmatprep.subr.mxu0 0.0
    %850 = vmatpush1.msra.mxu0 %v725
    %851 = vmatprep.subr.mxu0 0.0
    %852 = vmatpush1.msra.mxu0 %v726
    %853 = vmatprep.subr.mxu0 0.0
    %854 = vmatpush1.msra.mxu0 %v727
    %855 = vmatprep.subr.mxu0 0.0
    %856 = vmatpush1.msra.mxu0 %v728
    %857 = vmatprep.subr.mxu0 0.0
    %858 = vmatpush1.msra.mxu0 %v729
    %859 = vmatprep.subr.mxu0 0.0
    %860 = vmatpush1.msra.mxu0 %v730
    %861 = vmatprep.subr.mxu0 0.0
    %862 = vmatpush1.msra.mxu0 %v731
    %863 = vmatprep.subr.mxu0 0.0
    %864 = vmatpush1.msra.mxu0 %v732
    %865 = vmatprep.subr.mxu0 0.0
    %866 = vmatpush1.msra.mxu0 %v733
    %867 = vmatprep.subr.mxu0 0.0
    %868 = vmatpush1.msra.mxu0 %v734
    %869 = vmatprep.subr.mxu0 0.0
    %870 = vmatpush1.msra.mxu0 %v735
    %871 = vmatprep.subr.mxu0 0.0
    %872 = vmatpush1.msra.mxu0 0.0
    %873 = vmatprep.subr.mxu0 0.0
    %874 = vmatpush1.msra.mxu0 0.0
    %875 = vmatprep.subr.mxu0 0.0
    %876 = vmatpush1.msra.mxu0 0.0
    %877 = vmatprep.subr.mxu0 0.0
    %878 = vmatpush1.msra.mxu0 0.0
    %879 = vmatprep.subr.mxu0 0.0
    %880 = vmatpush1.msra.mxu0 0.0
    %881 = vmatprep.subr.mxu0 0.0
    %882 = vmatpush1.msra.mxu0 0.0
    %883 = vmatprep.subr.mxu0 0.0
    %884 = vmatpush1.msra.mxu0 0.0
    %885 = vmatprep.subr.mxu0 0.0
    %886 = vmatpush1.msra.mxu0 0.0
    %887 = vmatprep.subr.mxu0 0.0
    %888 = vmatpush1.msra.mxu0 0.0
    %889 = vmatprep.subr.mxu0 0.0
    %890 = vmatpush1.msra.mxu0 0.0
    %891 = vmatprep.subr.mxu0 0.0
    %892 = vmatpush1.msra.mxu0 0.0
    %893 = vmatprep.subr.mxu0 0.0
    %894 = vmatpush1.msra.mxu0 0.0
    %895 = vmatprep.subr.mxu0 0.0
    %896 = vmatpush1.msra.mxu0 0.0
    %897 = vmatprep.subr.mxu0 0.0
    %898 = vmatpush1.msra.mxu0 0.0
    %899 = vmatprep.subr.mxu0 0.0
    %900 = vmatpush1.msra.mxu0 0.0
    %901 = vmatprep.subr.mxu0 0.0
    %902 = vmatpush1.msra.mxu0 0.0
    %903 = vmatprep.mubr.f32.mxu0 0.0
    %904 = vmatmul.mubr.f32.gmra.mrb[0].mxu0 %v835
    %v905 = vpop.f32.mrb[0].mxu0
    %v906 = vadd.f32 0.0, %v905
    %v907 = vpop.f32.mrb[0].mxu0
    %908 = vmatprep.mubr.f32.mxu0 0.0
    %909 = vmatmul.mubr.f32.gmra.mrb[0].mxu0 %v836
    %v910 = vpop.f32.mrb[0].mxu0
    %v911 = vadd.f32 0.0, %v910
    %v912 = vpop.f32.mrb[0].mxu0
    %913 = vmatprep.mubr.f32.mxu0 0.0
    %914 = vmatmul.mubr.f32.gmra.mrb[0].mxu0 %v837
    %v915 = vpop.f32.mrb[0].mxu0
    %v916 = vadd.f32 0.0, %v915
    %v917 = vpop.f32.mrb[0].mxu0
    %918 = vmatprep.mubr.f32.mxu0 0.0
    %919 = vmatmul.mubr.f32.gmra.mrb[0].mxu0 %v838
    %v920 = vpop.f32.mrb[0].mxu0
    %v921 = vadd.f32 0.0, %v920
    %v922 = vpop.f32.mrb[0].mxu0
    %923 = vdwg.mxu0
    %v924 = vadd.f32 %v906, %v911
    %v925 = vadd.f32 %v924, %v916
    %v926 = vadd.f32 %v925, %v921
    %v927 = vrot.slane %v926, 4
    %v928 = vadd.f32 %v926, %v927
    %v929 = vrot.slane %v928, 2
    %v930 = vadd.f32 %v928, %v929
    %v931 = vrot.slane %v930, 1
    %v932 = vadd.f32 %v930, %v931
    %v933 = vmul.f32 %v932, 0.001953125
    %v934 = vadd.f32 %v933, 1e-05
    %v935 = vrsqrt.pop %v934
    %v936 = vld [vmem:[%s3] sm:$0x1]
    %v937 = vmul.f32 %v935, %v936
    %v938 = vlaneseq
    %v939 = vshrl.u32 %v938, 7
    %v940 = vsub.s32 0, %v939
    %v941 = vrot.slane %v937, %v940
    %v942 = vmul.f32 %v831, %v941
    %v943 = vmul.f32 %v832, %v941
    %v944 = vmul.f32 %v833, %v941
    %v945 = vmul.f32 %v834, %v941
    %v946 = vld [vmem:[%s4] sm:$0x1]
    %v948 = vlaneseq
    %v949 = vshrl.u32 %v948, 7
    %v950 = vsub.s32 0, %v949
    %v951 = vrot.slane %v946, %v950
    %v953 = vadd.f32 %v942, %v951
    %v954 = vadd.f32 %v943, %v951
    %v955 = vadd.f32 %v944, %v951
    %v956 = vadd.f32 %v945, %v951
    %v957 = vmax.f32 %v953, 0.0
    %v958 = vmax.f32 %v954, 0.0
    %v959 = vmax.f32 %v955, 0.0
    %v960 = vmax.f32 %v956, 0.0
    %961 = vst.msk [vmem:[#allocation3] sm:$0xff] %vm92, 0
    %962 = vst.msk [vmem:[#allocation3 + $0x8] sm:$0xff] %vm92, 0
    %963 = vst.msk [vmem:[#allocation3 + $0x10] sm:$0x11] %vm97, 0
    %964 = vst.msk [vmem:[#allocation3 + $0x18] sm:$0xff] %vm92, 0
    %965 = vst.msk [vmem:[#allocation3 + $0x20] sm:$0xff] %vm92, 0
    %966 = vst.msk [vmem:[#allocation3 + $0x28] sm:$0x11] %vm97, 0
    %v967 = vpack.c.bf16 %v958, %v957
    %v968 = vpack.c.bf16 %v960, %v959
    %v971 = vunpack.c.l.b16 %v967
    %v972 = vunpack.c.h.b16 %v967
    %v973 = vunpack.c.l.b16 %v968
    %v974 = vunpack.c.h.b16 %v968
    %v975 = vpack.c.b16 %v971, %v971
    %v976 = vpack.c.b16 %v972, %v972
    %v977 = vpack.c.b16 %v973, %v973
    %v978 = vpack.c.b16 %v974, %v974
    %v980 = vshrl.u32 %v975, 16
    %v982 = vrot.slane %v980, 7
    %v983 = vshll.u32 %v975, 16
    %v985 = vor.u32 %v982, %v983
    %v986 = vrot.slane %v982, 4
    %v988 = vshrl.u32 %v976, 16
    %v990 = vrot.slane %v988, 7
    %v991 = vshll.u32 %v976, 16
    %v993 = vor.u32 %v990, %v991
    %v994 = vsel %vm116, %v986, %v993
    %v995 = vrot.slane %v990, 4
    %v997 = vshrl.u32 %v977, 16
    %v999 = vrot.slane %v997, 7
    %v1000 = vshll.u32 %v977, 16
    %v1002 = vor.u32 %v999, %v1000
    %v1003 = vrot.slane %v999, 4
    %v1005 = vshrl.u32 %v978, 16
    %v1007 = vrot.slane %v1005, 7
    %v1008 = vshll.u32 %v978, 16
    %v1010 = vor.u32 %v1007, %v1008
    %v1011 = vsel %vm116, %v1003, %v1010
    %v1012 = vrot.slane %v1007, 4
    %1013 = vrot.lane.b32.xlu0 %v985, 8
    %v1014 = vpop.permute.xlu0 %1013
    %1015 = vrot.lane.b32.xlu0 %v994, 8
    %v1016 = vpop.permute.xlu0 %1015
    %1017 = vrot.lane.b32.xlu0 %v995, 8
    %v1018 = vpop.permute.xlu0 %1017
    %1019 = vrot.lane.b32.xlu0 %v1002, 8
    %v1020 = vpop.permute.xlu0 %1019
    %1021 = vrot.lane.b32.xlu0 %v1011, 8
    %v1022 = vpop.permute.xlu0 %1021
    %1023 = vrot.lane.b32.xlu0 %v1012, 8
    %v1024 = vpop.permute.xlu0 %1023
    %v1025 = vrot.slane %v1014, 4
    %v1026 = vrot.slane %v1016, 4
    %v1027 = vrot.slane %v1018, 4
    %v1028 = vrot.slane %v1020, 4
    %v1029 = vrot.slane %v1022, 4
    %v1030 = vrot.slane %v1024, 4
    %v1031 = vsel %vm169, %v1025, %v1014
    %v1032 = vsel %vm169, %v1026, %v1016
    %v1033 = vsel %vm169, %v1027, %v1018
    %v1034 = vsel %vm169, %v1028, %v1020
    %v1035 = vsel %vm169, %v1029, %v1022
    %v1036 = vsel %vm169, %v1030, %v1024
    %v1043 = vld [vmem:[#allocation3] sm:$0xff]
    %v1044 = vsel %vm188, %v1031, %v1043
    %1045 = vst [vmem:[#allocation3] sm:$0xff] %v1044
    %1046 = vst.msk [vmem:[#allocation3 + $0x8] sm:$0xff] %vm194, %v1032
    %v1047 = vld [vmem:[#allocation3 + $0x10] sm:$0x11]
    %v1048 = vsel %vm201, %v1033, %v1047
    %1049 = vst [vmem:[#allocation3 + $0x10] sm:$0x11] %v1048
    %v1050 = vld [vmem:[#allocation3 + $0x18] sm:$0xff]
    %v1051 = vsel %vm188, %v1034, %v1050
    %1052 = vst [vmem:[#allocation3 + $0x18] sm:$0xff] %v1051
    %1053 = vst.msk [vmem:[#allocation3 + $0x20] sm:$0xff] %vm194, %v1035
    %v1054 = vld [vmem:[#allocation3 + $0x28] sm:$0x11]
    %v1055 = vsel %vm201, %v1036, %v1054
    %1056 = vst [vmem:[#allocation3 + $0x28] sm:$0x11] %v1055
    %v1057 = vld [vmem:[#allocation3] sm:$0xff]
    %v1058 = vld [vmem:[#allocation3 + $0x8] sm:$0xff]
    %v1059 = vld [vmem:[#allocation3 + $0x10] sm:$0x11]
    %v1060 = vld [vmem:[#allocation3 + $0x18] sm:$0xff]
    %v1061 = vld [vmem:[#allocation3 + $0x20] sm:$0xff]
    %v1062 = vld [vmem:[#allocation3 + $0x28] sm:$0x11]
    %v1063 = vld [vmem:[#allocation9] sm:$0xf]
    %v1064 = vld [vmem:[#allocation9 + $0x4] sm:$0xf]
    %v1065 = vld [vmem:[#allocation9 + $0x8] sm:$0xf]
    %v1066 = vld [vmem:[#allocation9 + $0xc] sm:$0xf]
    %v1067 = vld [vmem:[#allocation9 + $0x10] sm:$0xf]
    %v1068 = vld [vmem:[#allocation9 + $0x14] sm:$0xf]
    %v1069 = vld [vmem:[#allocation9 + $0x18] sm:$0xf]
    %v1070 = vld [vmem:[#allocation9 + $0x1c] sm:$0xf]
    %v1071 = vld [vmem:[#allocation9 + $0x20] sm:$0xf]
    %v1072 = vld [vmem:[#allocation9 + $0x24] sm:$0xf]
    %v1073 = vld [vmem:[#allocation9 + $0x28] sm:$0xf]
    %v1074 = vld [vmem:[#allocation9 + $0x2c] sm:$0xf]
    %v1075 = vld [vmem:[#allocation9 + $0x30] sm:$0xf]
    %v1076 = vld [vmem:[#allocation9 + $0x34] sm:$0xf]
    %v1077 = vld [vmem:[#allocation9 + $0x38] sm:$0xf]
    %v1078 = vld [vmem:[#allocation9 + $0x3c] sm:$0xf]
    %v1079 = vld [vmem:[#allocation9 + $0x40] sm:$0xf]
    %v1080 = vld [vmem:[#allocation9 + $0x44] sm:$0xf]
    %v1082 = vshrl.u32 %v1057, 16
    %v1084 = vrot.slane %v1082, 4
    %v1085 = vshll.u32 %v1057, 16
    %v1087 = vrot.slane %v1085, 5
    %v1088 = vor.u32 %v1084, %v1087
    %v1089 = vrot.slane %v1088, 4
    %v1091 = vshll.u32 %v1058, 16
    %v1093 = vrot.slane %v1091, 5
    %v1094 = vsel %vm238, %v1089, %v1093
    %v1095 = vshrl.u32 %v1058, 16
    %v1097 = vrot.slane %v1095, 4
    %v1098 = vor.u32 %v1097, %v1093
    %v1099 = vrot.slane %v1098, 4
    %v1101 = vshll.u32 %v1059, 16
    %v1103 = vrot.slane %v1101, 5
    %v1104 = vsel %vm238, %v1099, %v1103
    %v1106 = vshrl.u32 %v1060, 16
    %v1108 = vrot.slane %v1106, 4
    %v1109 = vshll.u32 %v1060, 16
    %v1111 = vrot.slane %v1109, 5
    %v1112 = vor.u32 %v1108, %v1111
    %v1113 = vrot.slane %v1112, 4
    %v1115 = vshll.u32 %v1061, 16
    %v1117 = vrot.slane %v1115, 5
    %v1118 = vsel %vm238, %v1113, %v1117
    %v1119 = vshrl.u32 %v1061, 16
    %v1121 = vrot.slane %v1119, 4
    %v1122 = vor.u32 %v1121, %v1117
    %v1123 = vrot.slane %v1122, 4
    %v1125 = vshll.u32 %v1062, 16
    %v1127 = vrot.slane %v1125, 5
    %v1128 = vsel %vm238, %v1123, %v1127
    %v1129 = vld [vmem:[#allocation9 + $0x48] sm:$0xf]
    %v1130 = vld [vmem:[#allocation9 + $0x4c] sm:$0xf]
    %v1131 = vld [vmem:[#allocation9 + $0x50] sm:$0xf]
    %v1132 = vld [vmem:[#allocation9 + $0x54] sm:$0xf]
    %v1133 = vld [vmem:[#allocation9 + $0x58] sm:$0xf]
    %v1134 = vld [vmem:[#allocation9 + $0x5c] sm:$0xf]
    %v1135 = vld [vmem:[#allocation9 + $0x60] sm:$0xf]
    %v1136 = vld [vmem:[#allocation9 + $0x64] sm:$0xf]
    %v1137 = vld [vmem:[#allocation9 + $0x68] sm:$0xf]
    %v1138 = vld [vmem:[#allocation9 + $0x6c] sm:$0xf]
    %v1139 = vld [vmem:[#allocation9 + $0x70] sm:$0xf]
    %v1140 = vld [vmem:[#allocation9 + $0x74] sm:$0xf]
    %v1141 = vld [vmem:[#allocation9 + $0x78] sm:$0xf]
    %v1142 = vld [vmem:[#allocation9 + $0x7c] sm:$0xf]
    %v1143 = vld [vmem:[#allocation9 + $0x80] sm:$0xf]
    %v1144 = vld [vmem:[#allocation9 + $0x84] sm:$0xf]
    %v1145 = vld [vmem:[#allocation9 + $0x88] sm:$0xf]
    %v1146 = vld [vmem:[#allocation9 + $0x8c] sm:$0xf]
    %v1147 = vunpack.c.l.b16 %v1094
    %v1148 = vunpack.c.h.b16 %v1094
    %v1149 = vunpack.c.l.b16 %v1104
    %v1150 = vunpack.c.h.b16 %v1104
    %v1151 = vunpack.c.l.b16 %v1118
    %v1152 = vunpack.c.h.b16 %v1118
    %v1153 = vunpack.c.l.b16 %v1128
    %v1154 = vunpack.c.h.b16 %v1128
    %v1155 = vpack.c.b16 %v1149, %v1147
    %v1156 = vpack.c.b16 %v1150, %v1148
    %v1157 = vpack.c.b16 %v1153, %v1151
    %v1158 = vpack.c.b16 %v1154, %v1152
    %v1179 = vunpack.c.l.b16 %v1129
    %v1180 = vunpack.c.l.b16 %v1130
    %v1181 = vunpack.c.l.b16 %v1131
    %v1182 = vunpack.c.l.b16 %v1132
    %v1183 = vunpack.c.l.b16 %v1133
    %v1184 = vunpack.c.l.b16 %v1134
    %v1185 = vunpack.c.l.b16 %v1135
    %v1186 = vunpack.c.l.b16 %v1136
    %v1187 = vunpack.c.l.b16 %v1137
    %v1188 = vunpack.c.l.b16 %v1138
    %v1189 = vunpack.c.l.b16 %v1139
    %v1190 = vunpack.c.l.b16 %v1140
    %v1191 = vunpack.c.l.b16 %v1141
    %v1192 = vunpack.c.l.b16 %v1142
    %v1193 = vunpack.c.l.b16 %v1143
    %v1194 = vunpack.c.l.b16 %v1144
    %v1195 = vunpack.c.l.b16 %v1145
    %v1196 = vunpack.c.l.b16 %v1146
    %v1197 = vpack.c.b16 %v1180, %v1179
    %v1198 = vpack.c.b16 %v1182, %v1181
    %v1199 = vpack.c.b16 %v1184, %v1183
    %v1200 = vpack.c.b16 %v1186, %v1185
    %v1201 = vpack.c.b16 %v1188, %v1187
    %v1202 = vpack.c.b16 %v1190, %v1189
    %v1203 = vpack.c.b16 %v1192, %v1191
    %v1204 = vpack.c.b16 %v1194, %v1193
    %v1205 = vpack.c.b16 %v1196, %v1195
    %v1216 = vsel %vm373, %v1156, 0
    %v1219 = vsel %vm373, %v1158, 0
    %1221 = vmatprep.subr.bf16.mxu0 0
    %1222 = vmatpush1.bf16.msra.mxu0 %v1197
    %1223 = vmatprep.subr.bf16.mxu0 0
    %1224 = vmatpush1.bf16.msra.mxu0 %v1198
    %1225 = vmatprep.subr.bf16.mxu0 0
    %1226 = vmatpush1.bf16.msra.mxu0 %v1199
    %1227 = vmatprep.subr.bf16.mxu0 0
    %1228 = vmatpush1.bf16.msra.mxu0 %v1200
    %1229 = vmatprep.subr.bf16.mxu0 0
    %1230 = vmatpush1.bf16.msra.mxu0 %v1201
    %1231 = vmatprep.subr.bf16.mxu0 0
    %1232 = vmatpush1.bf16.msra.mxu0 %v1202
    %1233 = vmatprep.subr.bf16.mxu0 0
    %1234 = vmatpush1.bf16.msra.mxu0 %v1203
    %1235 = vmatprep.subr.bf16.mxu0 0
    %1236 = vmatpush1.bf16.msra.mxu0 %v1204
    %1237 = vmatprep.subr.bf16.mxu0 0
    %1238 = vmatpush1.bf16.msra.mxu0 %v1205
    %1239 = vmatprep.subr.bf16.mxu0 0
    %1240 = vmatpush1.bf16.msra.mxu0 0
    %1241 = vmatprep.subr.bf16.mxu0 0
    %1242 = vmatpush1.bf16.msra.mxu0 0
    %1243 = vmatprep.subr.bf16.mxu0 0
    %1244 = vmatpush1.bf16.msra.mxu0 0
    %1245 = vmatprep.subr.bf16.mxu0 0
    %1246 = vmatpush1.bf16.msra.mxu0 0
    %1247 = vmatprep.subr.bf16.mxu0 0
    %1248 = vmatpush1.bf16.msra.mxu0 0
    %1249 = vmatprep.subr.bf16.mxu0 0
    %1250 = vmatpush1.bf16.msra.mxu0 0
    %1251 = vmatprep.subr.bf16.mxu0 0
    %1252 = vmatpush1.bf16.msra.mxu0 0
    %1253 = vmatprep.mubr.bf16.mxu0 %v1216
    %1254 = vmatmul.mubr.bf16.gmra.mrb[0].mxu0 %v1155
    %v1255 = vpop.f32.mrb[0].mxu0
    %v1256 = vadd.f32 0.0, %v1255
    %v1257 = vpop.f32.mrb[0].mxu0
    %v1258 = vpop.f32.mrb[0].mxu0
    %v1259 = vadd.f32 0.0, %v1258
    %v1260 = vpop.f32.mrb[0].mxu0
    %1261 = vmatprep.mubr.bf16.mxu0 %v1219
    %1262 = vmatmul.mubr.bf16.gmra.mrb[0].mxu0 %v1157
    %v1263 = vpop.f32.mrb[0].mxu0
    %v1264 = vadd.f32 0.0, %v1263
    %v1265 = vpop.f32.mrb[0].mxu0
    %v1266 = vpop.f32.mrb[0].mxu0
    %v1267 = vadd.f32 0.0, %v1266
    %v1268 = vpop.f32.mrb[0].mxu0
    %1269 = vdwg.mxu0
    %v1274 = vunpack.c.l.b16 %v1057
    %v1275 = vunpack.c.h.b16 %v1057
    %v1276 = vunpack.c.l.b16 %v1058
    %v1277 = vunpack.c.h.b16 %v1058
    %v1278 = vunpack.c.l.b16 %v1060
    %v1279 = vunpack.c.h.b16 %v1060
    %v1280 = vunpack.c.l.b16 %v1061
    %v1281 = vunpack.c.h.b16 %v1061
    %v1282 = vpack.c.b16 %v1276, %v1274
    %v1283 = vpack.c.b16 %v1277, %v1275
    %v1284 = vpack.c.b16 %v1280, %v1278
    %v1285 = vpack.c.b16 %v1281, %v1279
    %v1306 = vunpack.c.l.b16 %v1063
    %v1307 = vunpack.c.l.b16 %v1064
    %v1308 = vunpack.c.l.b16 %v1065
    %v1309 = vunpack.c.l.b16 %v1066
    %v1310 = vunpack.c.l.b16 %v1067
    %v1311 = vunpack.c.l.b16 %v1068
    %v1312 = vunpack.c.l.b16 %v1069
    %v1313 = vunpack.c.l.b16 %v1070
    %v1314 = vunpack.c.l.b16 %v1071
    %v1315 = vunpack.c.l.b16 %v1072
    %v1316 = vunpack.c.l.b16 %v1073
    %v1317 = vunpack.c.l.b16 %v1074
    %v1318 = vunpack.c.l.b16 %v1075
    %v1319 = vunpack.c.l.b16 %v1076
    %v1320 = vunpack.c.l.b16 %v1077
    %v1321 = vunpack.c.l.b16 %v1078
    %v1322 = vunpack.c.l.b16 %v1079
    %v1323 = vunpack.c.l.b16 %v1080
    %v1324 = vpack.c.b16 %v1307, %v1306
    %v1325 = vpack.c.b16 %v1309, %v1308
    %v1326 = vpack.c.b16 %v1311, %v1310
    %v1327 = vpack.c.b16 %v1313, %v1312
    %v1328 = vpack.c.b16 %v1315, %v1314
    %v1329 = vpack.c.b16 %v1317, %v1316
    %v1330 = vpack.c.b16 %v1319, %v1318
    %v1331 = vpack.c.b16 %v1321, %v1320
    %v1332 = vpack.c.b16 %v1323, %v1322
    %v1343 = vsel %vm373, %v1283, 0
    %v1346 = vsel %vm373, %v1285, 0
    %1348 = vmatprep.subr.bf16.mxu0 0
    %1349 = vmatpush1.bf16.msra.mxu0 %v1324
    %1350 = vmatprep.subr.bf16.mxu0 0
    %1351 = vmatpush1.bf16.msra.mxu0 %v1325
    %1352 = vmatprep.subr.bf16.mxu0 0
    %1353 = vmatpush1.bf16.msra.mxu0 %v1326
    %1354 = vmatprep.subr.bf16.mxu0 0
    %1355 = vmatpush1.bf16.msra.mxu0 %v1327
    %1356 = vmatprep.subr.bf16.mxu0 0
    %1357 = vmatpush1.bf16.msra.mxu0 %v1328
    %1358 = vmatprep.subr.bf16.mxu0 0
    %1359 = vmatpush1.bf16.msra.mxu0 %v1329
    %1360 = vmatprep.subr.bf16.mxu0 0
    %1361 = vmatpush1.bf16.msra.mxu0 %v1330
    %1362 = vmatprep.subr.bf16.mxu0 0
    %1363 = vmatpush1.bf16.msra.mxu0 %v1331
    %1364 = vmatprep.subr.bf16.mxu0 0
    %1365 = vmatpush1.bf16.msra.mxu0 %v1332
    %1366 = vmatprep.subr.bf16.mxu0 0
    %1367 = vmatpush1.bf16.msra.mxu0 0
    %1368 = vmatprep.subr.bf16.mxu0 0
    %1369 = vmatpush1.bf16.msra.mxu0 0
    %1370 = vmatprep.subr.bf16.mxu0 0
    %1371 = vmatpush1.bf16.msra.mxu0 0
    %1372 = vmatprep.subr.bf16.mxu0 0
    %1373 = vmatpush1.bf16.msra.mxu0 0
    %1374 = vmatprep.subr.bf16.mxu0 0
    %1375 = vmatpush1.bf16.msra.mxu0 0
    %1376 = vmatprep.subr.bf16.mxu0 0
    %1377 = vmatpush1.bf16.msra.mxu0 0
    %1378 = vmatprep.subr.bf16.mxu0 0
    %1379 = vmatpush1.bf16.msra.mxu0 0
    %1380 = vmatprep.mubr.bf16.mxu0 %v1343
    %1381 = vmatmul.mubr.bf16.gmra.mrb[0].mxu0 %v1282
    %v1382 = vpop.f32.mrb[0].mxu0
    %v1383 = vadd.f32 %v1256, %v1382
    %v1384 = vpop.f32.mrb[0].mxu0
    %v1385 = vpop.f32.mrb[0].mxu0
    %v1386 = vadd.f32 %v1259, %v1385
    %v1387 = vpop.f32.mrb[0].mxu0
    %1388 = vmatprep.mubr.bf16.mxu0 %v1346
    %1389 = vmatmul.mubr.bf16.gmra.mrb[0].mxu0 %v1284
    %v1390 = vpop.f32.mrb[0].mxu0
    %v1391 = vadd.f32 %v1264, %v1390
    %v1392 = vpop.f32.mrb[0].mxu0
    %v1393 = vpop.f32.mrb[0].mxu0
    %v1394 = vadd.f32 %v1267, %v1393
    %v1395 = vpop.f32.mrb[0].mxu0
    %1396 = vdwg.mxu0
    %v1399 = vrot.slane %v1057, 5
    %v1400 = vrot.slane %v1399, 4
    %v1401 = vrot.slane %v1058, 5
    %v1402 = vsel %vm560, %v1400, %v1401
    %v1403 = vrot.slane %v1401, 4
    %v1404 = vrot.slane %v1059, 5
    %v1405 = vsel %vm560, %v1403, %v1404
    %v1406 = vrot.slane %v1060, 5
    %v1407 = vrot.slane %v1406, 4
    %v1408 = vrot.slane %v1061, 5
    %v1409 = vsel %vm560, %v1407, %v1408
    %v1410 = vrot.slane %v1408, 4
    %v1411 = vrot.slane %v1062, 5
    %v1412 = vsel %vm560, %v1410, %v1411
    %v1413 = vld [vmem:[#allocation9 + $0x90] sm:$0xf]
    %v1414 = vld [vmem:[#allocation9 + $0x94] sm:$0xf]
    %v1415 = vld [vmem:[#allocation9 + $0x98] sm:$0xf]
    %v1416 = vld [vmem:[#allocation9 + $0x9c] sm:$0xf]
    %v1417 = vld [vmem:[#allocation9 + $0xa0] sm:$0xf]
    %v1418 = vld [vmem:[#allocation9 + $0xa4] sm:$0xf]
    %v1419 = vld [vmem:[#allocation9 + $0xa8] sm:$0xf]
    %v1420 = vld [vmem:[#allocation9 + $0xac] sm:$0xf]
    %v1421 = vld [vmem:[#allocation9 + $0xb0] sm:$0xf]
    %v1422 = vld [vmem:[#allocation9 + $0xb4] sm:$0xf]
    %v1423 = vld [vmem:[#allocation9 + $0xb8] sm:$0xf]
    %v1424 = vld [vmem:[#allocation9 + $0xbc] sm:$0xf]
    %v1425 = vld [vmem:[#allocation9 + $0xc0] sm:$0xf]
    %v1426 = vld [vmem:[#allocation9 + $0xc4] sm:$0xf]
    %v1427 = vld [vmem:[#allocation9 + $0xc8] sm:$0xf]
    %v1428 = vld [vmem:[#allocation9 + $0xcc] sm:$0xf]
    %v1429 = vld [vmem:[#allocation9 + $0xd0] sm:$0xf]
    %v1430 = vld [vmem:[#allocation9 + $0xd4] sm:$0xf]
    %v1431 = vunpack.c.l.b16 %v1402
    %v1432 = vunpack.c.h.b16 %v1402
    %v1433 = vunpack.c.l.b16 %v1405
    %v1434 = vunpack.c.h.b16 %v1405
    %v1435 = vunpack.c.l.b16 %v1409
    %v1436 = vunpack.c.h.b16 %v1409
    %v1437 = vunpack.c.l.b16 %v1412
    %v1438 = vunpack.c.h.b16 %v1412
    %v1439 = vpack.c.b16 %v1433, %v1431
    %v1440 = vpack.c.b16 %v1434, %v1432
    %v1441 = vpack.c.b16 %v1437, %v1435
    %v1442 = vpack.c.b16 %v1438, %v1436
    %v1463 = vunpack.c.l.b16 %v1413
    %v1464 = vunpack.c.l.b16 %v1414
    %v1465 = vunpack.c.l.b16 %v1415
    %v1466 = vunpack.c.l.b16 %v1416
    %v1467 = vunpack.c.l.b16 %v1417
    %v1468 = vunpack.c.l.b16 %v1418
    %v1469 = vunpack.c.l.b16 %v1419
    %v1470 = vunpack.c.l.b16 %v1420
    %v1471 = vunpack.c.l.b16 %v1421
    %v1472 = vunpack.c.l.b16 %v1422
    %v1473 = vunpack.c.l.b16 %v1423
    %v1474 = vunpack.c.l.b16 %v1424
    %v1475 = vunpack.c.l.b16 %v1425
    %v1476 = vunpack.c.l.b16 %v1426
    %v1477 = vunpack.c.l.b16 %v1427
    %v1478 = vunpack.c.l.b16 %v1428
    %v1479 = vunpack.c.l.b16 %v1429
    %v1480 = vunpack.c.l.b16 %v1430
    %v1481 = vpack.c.b16 %v1464, %v1463
    %v1482 = vpack.c.b16 %v1466, %v1465
    %v1483 = vpack.c.b16 %v1468, %v1467
    %v1484 = vpack.c.b16 %v1470, %v1469
    %v1485 = vpack.c.b16 %v1472, %v1471
    %v1486 = vpack.c.b16 %v1474, %v1473
    %v1487 = vpack.c.b16 %v1476, %v1475
    %v1488 = vpack.c.b16 %v1478, %v1477
    %v1489 = vpack.c.b16 %v1480, %v1479
    %v1500 = vsel %vm373, %v1440, 0
    %v1503 = vsel %vm373, %v1442, 0
    %1505 = vmatprep.subr.bf16.mxu0 0
    %1506 = vmatpush1.bf16.msra.mxu0 %v1481
    %1507 = vmatprep.subr.bf16.mxu0 0
    %1508 = vmatpush1.bf16.msra.mxu0 %v1482
    %1509 = vmatprep.subr.bf16.mxu0 0
    %1510 = vmatpush1.bf16.msra.mxu0 %v1483
    %1511 = vmatprep.subr.bf16.mxu0 0
    %1512 = vmatpush1.bf16.msra.mxu0 %v1484
    %1513 = vmatprep.subr.bf16.mxu0 0
    %1514 = vmatpush1.bf16.msra.mxu0 %v1485
    %1515 = vmatprep.subr.bf16.mxu0 0
    %1516 = vmatpush1.bf16.msra.mxu0 %v1486
    %1517 = vmatprep.subr.bf16.mxu0 0
    %1518 = vmatpush1.bf16.msra.mxu0 %v1487
    %1519 = vmatprep.subr.bf16.mxu0 0
    %1520 = vmatpush1.bf16.msra.mxu0 %v1488
    %1521 = vmatprep.subr.bf16.mxu0 0
    %1522 = vmatpush1.bf16.msra.mxu0 %v1489
    %1523 = vmatprep.subr.bf16.mxu0 0
    %1524 = vmatpush1.bf16.msra.mxu0 0
    %1525 = vmatprep.subr.bf16.mxu0 0
    %1526 = vmatpush1.bf16.msra.mxu0 0
    %1527 = vmatprep.subr.bf16.mxu0 0
    %1528 = vmatpush1.bf16.msra.mxu0 0
    %1529 = vmatprep.subr.bf16.mxu0 0
    %1530 = vmatpush1.bf16.msra.mxu0 0
    %1531 = vmatprep.subr.bf16.mxu0 0
    %1532 = vmatpush1.bf16.msra.mxu0 0
    %1533 = vmatprep.subr.bf16.mxu0 0
    %1534 = vmatpush1.bf16.msra.mxu0 0
    %1535 = vmatprep.subr.bf16.mxu0 0
    %1536 = vmatpush1.bf16.msra.mxu0 0
    %1537 = vmatprep.mubr.bf16.mxu0 %v1500
    %1538 = vmatmul.mubr.bf16.gmra.mrb[0].mxu0 %v1439
    %v1539 = vpop.f32.mrb[0].mxu0
    %v1540 = vadd.f32 0.0, %v1539
    %v1541 = vpop.f32.mrb[0].mxu0
    %v1542 = vpop.f32.mrb[0].mxu0
    %v1543 = vadd.f32 0.0, %v1542
    %v1544 = vpop.f32.mrb[0].mxu0
    %1545 = vmatprep.mubr.bf16.mxu0 %v1503
    %1546 = vmatmul.mubr.bf16.gmra.mrb[0].mxu0 %v1441
    %v1547 = vpop.f32.mrb[0].mxu0
    %v1548 = vadd.f32 0.0, %v1547
    %v1549 = vpop.f32.mrb[0].mxu0
    %v1550 = vpop.f32.mrb[0].mxu0
    %v1551 = vadd.f32 0.0, %v1550
    %v1552 = vpop.f32.mrb[0].mxu0
    %1553 = vdwg.mxu0
    %v1554 = vadd.f32 %v1383, %v1540
    %v1555 = vadd.f32 %v1386, %v1543
    %v1556 = vadd.f32 %v1391, %v1548
    %v1557 = vadd.f32 %v1394, %v1551
    %v1558 = vld [vmem:[#allocation10] sm:$0xff]
    %v1559 = vld [vmem:[#allocation10 + $0x8] sm:$0xff]
    %v1560 = vld [vmem:[#allocation10 + $0x10] sm:$0xff]
    %v1561 = vld [vmem:[#allocation10 + $0x18] sm:$0xff]
    %v1562 = vld [vmem:[#allocation10 + $0x20] sm:$0xff]
    %v1563 = vld [vmem:[#allocation10 + $0x28] sm:$0xff]
    %v1564 = vld [vmem:[#allocation10 + $0x30] sm:$0xff]
    %v1565 = vld [vmem:[#allocation10 + $0x38] sm:$0xff]
    %v1566 = vld [vmem:[#allocation10 + $0x40] sm:$0xff]
    %v1567 = vld [vmem:[#allocation10 + $0x48] sm:$0xff]
    %v1568 = vld [vmem:[#allocation10 + $0x50] sm:$0xff]
    %v1569 = vld [vmem:[#allocation10 + $0x58] sm:$0xff]
    %v1570 = vld [vmem:[#allocation10 + $0x60] sm:$0xff]
    %v1571 = vld [vmem:[#allocation10 + $0x68] sm:$0xff]
    %v1572 = vld [vmem:[#allocation10 + $0x70] sm:$0xff]
    %v1573 = vld [vmem:[#allocation10 + $0x78] sm:$0xff]
    %1574 = vmatprep.subr.mxu0 0.0
    %1575 = vmatpush1.msra.mxu0 %v1558
    %1576 = vmatprep.subr.mxu0 0.0
    %1577 = vmatpush1.msra.mxu0 %v1559
    %1578 = vmatprep.subr.mxu0 0.0
    %1579 = vmatpush1.msra.mxu0 %v1560
    %1580 = vmatprep.subr.mxu0 0.0
    %1581 = vmatpush1.msra.mxu0 %v1561
    %1582 = vmatprep.subr.mxu0 0.0
    %1583 = vmatpush1.msra.mxu0 %v1562
    %1584 = vmatprep.subr.mxu0 0.0
    %1585 = vmatpush1.msra.mxu0 %v1563
    %1586 = vmatprep.subr.mxu0 0.0
    %1587 = vmatpush1.msra.mxu0 %v1564
    %1588 = vmatprep.subr.mxu0 0.0
    %1589 = vmatpush1.msra.mxu0 %v1565
    %1590 = vmatprep.subr.mxu0 0.0
    %1591 = vmatpush1.msra.mxu0 %v1566
    %1592 = vmatprep.subr.mxu0 0.0
    %1593 = vmatpush1.msra.mxu0 %v1567
    %1594 = vmatprep.subr.mxu0 0.0
    %1595 = vmatpush1.msra.mxu0 %v1568
    %1596 = vmatprep.subr.mxu0 0.0
    %1597 = vmatpush1.msra.mxu0 %v1569
    %1598 = vmatprep.subr.mxu0 0.0
    %1599 = vmatpush1.msra.mxu0 %v1570
    %1600 = vmatprep.subr.mxu0 0.0
    %1601 = vmatpush1.msra.mxu0 %v1571
    %1602 = vmatprep.subr.mxu0 0.0
    %1603 = vmatpush1.msra.mxu0 %v1572
    %1604 = vmatprep.subr.mxu0 0.0
    %1605 = vmatpush1.msra.mxu0 %v1573
    %1606 = vmatprep.subr.mxu0 0.0
    %1607 = vmatpush1.msra.mxu0 0.0
    %1608 = vmatprep.subr.mxu0 0.0
    %1609 = vmatpush1.msra.mxu0 0.0
    %1610 = vmatprep.subr.mxu0 0.0
    %1611 = vmatpush1.msra.mxu0 0.0
    %1612 = vmatprep.subr.mxu0 0.0
    %1613 = vmatpush1.msra.mxu0 0.0
    %1614 = vmatprep.subr.mxu0 0.0
    %1615 = vmatpush1.msra.mxu0 0.0
    %1616 = vmatprep.subr.mxu0 0.0
    %1617 = vmatpush1.msra.mxu0 0.0
    %1618 = vmatprep.subr.mxu0 0.0
    %1619 = vmatpush1.msra.mxu0 0.0
    %1620 = vmatprep.subr.mxu0 0.0
    %1621 = vmatpush1.msra.mxu0 0.0
    %1622 = vmatprep.subr.mxu0 0.0
    %1623 = vmatpush1.msra.mxu0 0.0
    %1624 = vmatprep.subr.mxu0 0.0
    %1625 = vmatpush1.msra.mxu0 0.0
    %1626 = vmatprep.subr.mxu0 0.0
    %1627 = vmatpush1.msra.mxu0 0.0
    %1628 = vmatprep.subr.mxu0 0.0
    %1629 = vmatpush1.msra.mxu0 0.0
    %1630 = vmatprep.subr.mxu0 0.0
    %1631 = vmatpush1.msra.mxu0 0.0
    %1632 = vmatprep.subr.mxu0 0.0
    %1633 = vmatpush1.msra.mxu0 0.0
    %1634 = vmatprep.subr.mxu0 0.0
    %1635 = vmatpush1.msra.mxu0 0.0
    %1636 = vmatprep.subr.mxu0 0.0
    %1637 = vmatpush1.msra.mxu0 0.0
    %1638 = vmatprep.mubr.f32.mxu0 0.0
    %1639 = vmatmul.mubr.f32.gmra.mrb[0].mxu0 %v1554
    %v1640 = vpop.f32.mrb[0].mxu0
    %v1641 = vadd.f32 0.0, %v1640
    %v1642 = vpop.f32.mrb[0].mxu0
    %1643 = vmatprep.mubr.f32.mxu0 0.0
    %1644 = vmatmul.mubr.f32.gmra.mrb[0].mxu0 %v1555
    %v1645 = vpop.f32.mrb[0].mxu0
    %v1646 = vadd.f32 0.0, %v1645
    %v1647 = vpop.f32.mrb[0].mxu0
    %1648 = vmatprep.mubr.f32.mxu0 0.0
    %1649 = vmatmul.mubr.f32.gmra.mrb[0].mxu0 %v1556
    %v1650 = vpop.f32.mrb[0].mxu0
    %v1651 = vadd.f32 0.0, %v1650
    %v1652 = vpop.f32.mrb[0].mxu0
    %1653 = vmatprep.mubr.f32.mxu0 0.0
    %1654 = vmatmul.mubr.f32.gmra.mrb[0].mxu0 %v1557
    %v1655 = vpop.f32.mrb[0].mxu0
    %v1656 = vadd.f32 0.0, %v1655
    %v1657 = vpop.f32.mrb[0].mxu0
    %1658 = vdwg.mxu0
    %v1659 = vadd.f32 %v1641, %v1646
    %v1660 = vadd.f32 %v1659, %v1651
    %v1661 = vadd.f32 %v1660, %v1656
    %v1662 = vrot.slane %v1661, 4
    %v1663 = vadd.f32 %v1661, %v1662
    %v1664 = vrot.slane %v1663, 2
    %v1665 = vadd.f32 %v1663, %v1664
    %v1666 = vrot.slane %v1665, 1
    %v1667 = vadd.f32 %v1665, %v1666
    %v1668 = vmul.f32 %v1667, 0.001953125
    %v1669 = vsub.f32 %v1554, %v1668
    %v1670 = vsub.f32 %v1555, %v1668
    %v1671 = vsub.f32 %v1556, %v1668
    %v1672 = vsub.f32 %v1557, %v1668
    %v1673 = vmul.f32 %v1669, %v1669
    %v1674 = vmul.f32 %v1670, %v1670
    %v1675 = vmul.f32 %v1671, %v1671
    %v1676 = vmul.f32 %v1672, %v1672
    %1677 = vmatprep.subr.mxu0 0.0
    %1678 = vmatpush1.msra.mxu0 %v1558
    %1679 = vmatprep.subr.mxu0 0.0
    %1680 = vmatpush1.msra.mxu0 %v1559
    %1681 = vmatprep.subr.mxu0 0.0
    %1682 = vmatpush1.msra.mxu0 %v1560
    %1683 = vmatprep.subr.mxu0 0.0
    %1684 = vmatpush1.msra.mxu0 %v1561
    %1685 = vmatprep.subr.mxu0 0.0
    %1686 = vmatpush1.msra.mxu0 %v1562
    %1687 = vmatprep.subr.mxu0 0.0
    %1688 = vmatpush1.msra.mxu0 %v1563
    %1689 = vmatprep.subr.mxu0 0.0
    %1690 = vmatpush1.msra.mxu0 %v1564
    %1691 = vmatprep.subr.mxu0 0.0
    %1692 = vmatpush1.msra.mxu0 %v1565
    %1693 = vmatprep.subr.mxu0 0.0
    %1694 = vmatpush1.msra.mxu0 %v1566
    %1695 = vmatprep.subr.mxu0 0.0
    %1696 = vmatpush1.msra.mxu0 %v1567
    %1697 = vmatprep.subr.mxu0 0.0
    %1698 = vmatpush1.msra.mxu0 %v1568
    %1699 = vmatprep.subr.mxu0 0.0
    %1700 = vmatpush1.msra.mxu0 %v1569
    %1701 = vmatprep.subr.mxu0 0.0
    %1702 = vmatpush1.msra.mxu0 %v1570
    %1703 = vmatprep.subr.mxu0 0.0
    %1704 = vmatpush1.msra.mxu0 %v1571
    %1705 = vmatprep.subr.mxu0 0.0
    %1706 = vmatpush1.msra.mxu0 %v1572
    %1707 = vmatprep.subr.mxu0 0.0
    %1708 = vmatpush1.msra.mxu0 %v1573
    %1709 = vmatprep.subr.mxu0 0.0
    %1710 = vmatpush1.msra.mxu0 0.0
    %1711 = vmatprep.subr.mxu0 0.0
    %1712 = vmatpush1.msra.mxu0 0.0
    %1713 = vmatprep.subr.mxu0 0.0
    %1714 = vmatpush1.msra.mxu0 0.0
    %1715 = vmatprep.subr.mxu0 0.0
    %1716 = vmatpush1.msra.mxu0 0.0
    %1717 = vmatprep.subr.mxu0 0.0
    %1718 = vmatpush1.msra.mxu0 0.0
    %1719 = vmatprep.subr.mxu0 0.0
    %1720 = vmatpush1.msra.mxu0 0.0
    %1721 = vmatprep.subr.mxu0 0.0
    %1722 = vmatpush1.msra.mxu0 0.0
    %1723 = vmatprep.subr.mxu0 0.0
    %1724 = vmatpush1.msra.mxu0 0.0
    %1725 = vmatprep.subr.mxu0 0.0
    %1726 = vmatpush1.msra.mxu0 0.0
    %1727 = vmatprep.subr.mxu0 0.0
    %1728 = vmatpush1.msra.mxu0 0.0
    %1729 = vmatprep.subr.mxu0 0.0
    %1730 = vmatpush1.msra.mxu0 0.0
    %1731 = vmatprep.subr.mxu0 0.0
    %1732 = vmatpush1.msra.mxu0 0.0
    %1733 = vmatprep.subr.mxu0 0.0
    %1734 = vmatpush1.msra.mxu0 0.0
    %1735 = vmatprep.subr.mxu0 0.0
    %1736 = vmatpush1.msra.mxu0 0.0
    %1737 = vmatprep.subr.mxu0 0.0
    %1738 = vmatpush1.msra.mxu0 0.0
    %1739 = vmatprep.subr.mxu0 0.0
    %1740 = vmatpush1.msra.mxu0 0.0
    %1741 = vmatprep.mubr.f32.mxu0 0.0
    %1742 = vmatmul.mubr.f32.gmra.mrb[0].mxu0 %v1673
    %v1743 = vpop.f32.mrb[0].mxu0
    %v1744 = vadd.f32 0.0, %v1743
    %v1745 = vpop.f32.mrb[0].mxu0
    %1746 = vmatprep.mubr.f32.mxu0 0.0
    %1747 = vmatmul.mubr.f32.gmra.mrb[0].mxu0 %v1674
    %v1748 = vpop.f32.mrb[0].mxu0
    %v1749 = vadd.f32 0.0, %v1748
    %v1750 = vpop.f32.mrb[0].mxu0
    %1751 = vmatprep.mubr.f32.mxu0 0.0
    %1752 = vmatmul.mubr.f32.gmra.mrb[0].mxu0 %v1675
    %v1753 = vpop.f32.mrb[0].mxu0
    %v1754 = vadd.f32 0.0, %v1753
    %v1755 = vpop.f32.mrb[0].mxu0
    %1756 = vmatprep.mubr.f32.mxu0 0.0
    %1757 = vmatmul.mubr.f32.gmra.mrb[0].mxu0 %v1676
    %v1758 = vpop.f32.mrb[0].mxu0
    %v1759 = vadd.f32 0.0, %v1758
    %v1760 = vpop.f32.mrb[0].mxu0
    %1761 = vdwg.mxu0
    %v1762 = vadd.f32 %v1744, %v1749
    %v1763 = vadd.f32 %v1762, %v1754
    %v1764 = vadd.f32 %v1763, %v1759
    %v1765 = vrot.slane %v1764, 4
    %v1766 = vadd.f32 %v1764, %v1765
    %v1767 = vrot.slane %v1766, 2
    %v1768 = vadd.f32 %v1766, %v1767
    %v1769 = vrot.slane %v1768, 1
    %v1770 = vadd.f32 %v1768, %v1769
    %v1771 = vmul.f32 %v1770, 0.001953125
    %v1772 = vadd.f32 %v1771, 1e-05
    %v1773 = vrsqrt.pop %v1772
    %v1774 = vld [vmem:[%s5] sm:$0x1]
    %v1775 = vmul.f32 %v1773, %v1774
    %v1776 = vlaneseq
    %v1777 = vshrl.u32 %v1776, 7
    %v1778 = vsub.s32 0, %v1777
    %v1779 = vrot.slane %v1775, %v1778
    %v1780 = vmul.f32 %v1669, %v1779
    %v1781 = vmul.f32 %v1670, %v1779
    %v1782 = vmul.f32 %v1671, %v1779
    %v1783 = vmul.f32 %v1672, %v1779
    %v1784 = vld [vmem:[%s6] sm:$0x1]
    %v1786 = vlaneseq
    %v1787 = vshrl.u32 %v1786, 7
    %v1788 = vsub.s32 0, %v1787
    %v1789 = vrot.slane %v1784, %v1788
    %v1791 = vadd.f32 %v1780, %v1789
    %v1792 = vadd.f32 %v1781, %v1789
    %v1793 = vadd.f32 %v1782, %v1789
    %v1794 = vadd.f32 %v1783, %v1789
    %v1795 = vld [vmem:[#allocation4] sm:$0xff]
    %v1796 = vld [vmem:[#allocation4 + $0x8] sm:$0xff]
    %v1797 = vld [vmem:[#allocation4 + $0x10] sm:$0xff]
    %v1798 = vld [vmem:[#allocation4 + $0x18] sm:$0xff]
    %v1799 = vadd.f32 %v1791, %v1795
    %v1800 = vadd.f32 %v1792, %v1796
    %v1801 = vadd.f32 %v1793, %v1797
    %v1802 = vadd.f32 %v1794, %v1798
    %v1803 = vmax.f32 %v1799, 0.0
    %v1804 = vmax.f32 %v1800, 0.0
    %v1805 = vmax.f32 %v1801, 0.0
    %v1806 = vmax.f32 %v1802, 0.0
    %1807 = vst [vmem:[#allocation12] sm:$0xff] %v1803
    %1808 = vst [vmem:[#allocation12 + $0x8] sm:$0xff] %v1804
    %1809 = vst [vmem:[#allocation12 + $0x10] sm:$0xff] %v1805
    %1810 = vst [vmem:[#allocation12 + $0x18] sm:$0xff] %v1806
    // Predicated region
    $region50: #{tpu_custom_call.1} parent=1 // pred_check
      _
    $region51: #{tpu_custom_call.1} parent=1 // pred_check_branch
      %1812 = sbr.rel (0) target = $region53
    $region52: #{tpu_custom_call.1} parent=1 // pred_region
      %s1814 = ssub.s32 512, 512
      %1815 = vsyncadd [#allocation6], %s1814
      %s1816 = sshll.u32 [#allocation12], 4
      %s1817 = int_to_ptr.vmem [resolvable:$true] %s1816
      %1822 = dma.vmem_to_hbm [thread:$0]  %s1817, 512, %s8, [#allocation6], 128, 128, 8
    $region53: #{tpu_custom_call.1} parent=1 // pred_fallthru
      _
    // Predicated region
    $region54: #{tpu_custom_call.1} parent=1 // pred_check
      _
    $region55: #{tpu_custom_call.1} parent=1 // pred_check_branch
      %1824 = sbr.rel (0) target = $region57
    $region56: #{tpu_custom_call.1} parent=1 // pred_region
      %1825 = dma.done [#allocation6], 512
    $region57: #{tpu_custom_call.1} parent=1 // pred_fallthru
      _
    %1826 = vsyncpa [#allocation5], 1
    %1827 = vsyncpa [#allocation8], 1
    %1828 = vsyncpa [#allocation11], 1
    %1829 = vsyncpa [#allocation6], 1

</llo_original>
